<compile_context>
chip_gen: v7x
topology: tpu7x:2x2x1
jax: 0.10.0
libtpu: 0.0.40
codegen_flags: <defaults>
</compile_context>

<pallas_src>
import functools

import jax
import jax.numpy as jnp
from jax.experimental import pallas as pl
from jax.experimental.pallas import tpu as pltpu


def _coherence_topk_kernel(tgt_ref, dbseg_ref, db_ref, dre_ref, dim_ref, o_ref, *, nref):
    # Block shapes:
    #   tgt_ref   : (1, C_T,  nseg, nperseg)   segmented target channels
    #   dbseg_ref : (1, N_db, nseg, nperseg)   segmented database channels
    #   db_ref    : (1, N_db, L)               raw database (for the gather)
    #   dre_ref   : (nperseg, F)               Hann-windowed real DFT matrix
    #   dim_ref   : (nperseg, F)               Hann-windowed imag DFT matrix
    #   o_ref     : (1, C_T, nref, L)
    tgt = tgt_ref[0]                       # (C_T, nseg, nperseg)
    dbs = dbseg_ref[0]                     # (N_db, nseg, nperseg)
    db = db_ref[0]                         # (N_db, L)
    dre = dre_ref[...]
    dim_ = dim_ref[...]

    C_T, nseg, _ = tgt.shape
    N_db = dbs.shape[0]
    F = dre.shape[1]

    pxx = jnp.zeros((C_T, F), jnp.float32)
    pyy = jnp.zeros((N_db, F), jnp.float32)
    pxy_re = jnp.zeros((C_T, N_db, F), jnp.float32)
    pxy_im = jnp.zeros((C_T, N_db, F), jnp.float32)

    # Welch accumulation over segments (static loop; nseg is small).
    for s in range(nseg):
        xs = tgt[:, s, :]                  # (C_T, nperseg)
        ys = dbs[:, s, :]                  # (N_db, nperseg)
        xr = jnp.dot(xs, dre, preferred_element_type=jnp.float32)
        xi = jnp.dot(xs, dim_, preferred_element_type=jnp.float32)
        yr = jnp.dot(ys, dre, preferred_element_type=jnp.float32)
        yi = jnp.dot(ys, dim_, preferred_element_type=jnp.float32)
        pxx = pxx + xr * xr + xi * xi
        pyy = pyy + yr * yr + yi * yi
        # cross spectrum X * conj(Y), accumulated (normalization cancels in coherence)
        pxy_re = pxy_re + xr[:, None, :] * yr[None, :, :] + xi[:, None, :] * yi[None, :, :]
        pxy_im = pxy_im + xi[:, None, :] * yr[None, :, :] - xr[:, None, :] * yi[None, :, :]

    denom = pxx[:, None, :] * pyy[None, :, :] + 1e-12
    coh = (pxy_re * pxy_re + pxy_im * pxy_im) / denom          # (C_T, N_db, F)
    scores = jnp.mean(coh, axis=-1)                            # (C_T, N_db)

    # top-nref selection + gather (one-hot @ db), rank-major inside each channel.
    col = jax.lax.broadcasted_iota(jnp.int32, (C_T, N_db), 1)
    s_work = scores
    for r in range(nref):
        m = jnp.max(s_work, axis=-1, keepdims=True)
        eq = s_work == m
        idx = jnp.min(jnp.where(eq, col, N_db), axis=-1, keepdims=True)  # first max
        first = col == idx                                      # (C_T, N_db) one-hot mask
        sel = first.astype(jnp.float32)
        o_ref[0, :, r, :] = jnp.dot(sel, db, preferred_element_type=jnp.float32)
        s_work = jnp.where(first, -jnp.inf, s_work)


def ts_coher_analysis(target_series, TS_database, *, nref, nperseg):
    """Pallas implementation of TS_CoherAnalysis.forward."""
    B, C_T, L = target_series.shape
    _, N_db, Ldb = TS_database.shape
    assert Ldb == L

    # Degenerate branch from the PyTorch module: not enough database series.
    # Pure shape manipulation -> plain JAX (no kernel needed).
    if nref > N_db:
        rep = jnp.tile(TS_database.astype(jnp.float32), (1, C_T, 1))
        pad = jnp.zeros((B, (nref - N_db) * C_T, L), jnp.float32)
        return jnp.concatenate([rep, pad], axis=1)

    nseg = L // nperseg
    assert nseg >= 1, "nperseg must not exceed L"
    F = nperseg // 2 + 1

    # Hann-windowed rDFT matrices (window folded in; built once on host).
    n = jnp.arange(nperseg, dtype=jnp.float32)
    f = jnp.arange(F, dtype=jnp.float32)
    win = 0.5 - 0.5 * jnp.cos(2.0 * jnp.pi * n / nperseg)
    ang = 2.0 * jnp.pi * n[:, None] * f[None, :] / nperseg
    dft_re = win[:, None] * jnp.cos(ang)
    dft_im = -win[:, None] * jnp.sin(ang)

    # TODO(synk): non-overlapping segments; trailing L % nperseg samples are dropped
    # (scipy's Welch default would use 50% overlap).
    Lt = nseg * nperseg
    tgt_seg = target_series.astype(jnp.float32)[:, :, :Lt].reshape(B, C_T, nseg, nperseg)
    db_seg = TS_database.astype(jnp.float32)[:, :, :Lt].reshape(B, N_db, nseg, nperseg)
    db_f32 = TS_database.astype(jnp.float32)

    kern = functools.partial(_coherence_topk_kernel, nref=nref)
    const2 = lambda b: (0, 0)
    out4 = pl.pallas_call(
        kern,
        out_shape=jax.ShapeDtypeStruct((B, C_T, nref, L), jnp.float32),
        grid=(B,),
        in_specs=[
            pl.BlockSpec((1, C_T, nseg, nperseg), lambda b: (b, 0, 0, 0)),
            pl.BlockSpec((1, N_db, nseg, nperseg), lambda b: (b, 0, 0, 0)),
            pl.BlockSpec((1, N_db, L), lambda b: (b, 0, 0)),
            pl.BlockSpec((nperseg, F), const2),
            pl.BlockSpec((nperseg, F), const2),
        ],
        out_specs=pl.BlockSpec((1, C_T, nref, L), lambda b: (b, 0, 0, 0)),
        compiler_params=pltpu.CompilerParams(dimension_semantics=("parallel",)),
    )(tgt_seg, db_seg, db_f32, dft_re, dft_im)

    # Contiguous HBM reshape (free): (B, C_T, nref, L) -> (B, C_T*nref, L),
    # matching the PyTorch .view(B, C_T * nref, L).
    return out4.reshape(B, C_T * nref, L)


if __name__ == "__main__":
    key = jax.random.PRNGKey(0)
    k1, k2, k3 = jax.random.split(key, 3)

    B, C_T, N_db, L = 2, 2, 6, 256
    NREF, NPERSEG = 3, 64

    target_series = jax.random.normal(k1, (B, C_T, L), jnp.float32)
    TS_database = jax.random.normal(k2, (B, N_db, L), jnp.float32)
    # Make the first C_T database channels noisy copies of the targets so the
    # coherence ranking is well-separated / meaningful.
    noise = 0.3 * jax.random.normal(k3, (B, C_T, L), jnp.float32)
    TS_database = TS_database.at[:, :C_T, :].set(target_series + noise)

    out = ts_coher_analysis(target_series, TS_database, nref=NREF, nperseg=NPERSEG)
    out = jax.block_until_ready(out)

    assert out.shape == (B, C_T * NREF, L)
    assert bool(jnp.all(jnp.isfinite(out)))
    # Gather correctness: every returned sequence must be an exact row of TS_database.
    diff = jnp.min(
        jnp.max(jnp.abs(out[:, :, None, :] - TS_database[:, None, :, :]), axis=-1),
        axis=-1,
    )
    assert bool(jnp.all(diff < 1e-5))

    print("KERNEL_OK")
</pallas_src>

<mosaic_0001>
module attributes {stable_mosaic.version = 11 : i64} {
  func.func @_coherence_topk_kernel(%arg0: i32, %arg1: memref<1x2x4x64xf32, #tpu.memory_space<vmem>>, %arg2: memref<1x6x4x64xf32, #tpu.memory_space<vmem>>, %arg3: memref<1x6x256xf32, #tpu.memory_space<vmem>>, %arg4: memref<64x33xf32, #tpu.memory_space<vmem>>, %arg5: memref<64x33xf32, #tpu.memory_space<vmem>>, %arg6: memref<1x2x3x256xf32, #tpu.memory_space<vmem>>) attributes {dimension_semantics = [#tpu.dimension_semantics<parallel>], iteration_bounds = array<i64: 2>, scalar_prefetch = 0 : i64, scratch_operands = 0 : i64, tpu.core_type = #tpu.core_type<tc>, window_params = [{transform_indices = @transform_0, window_bounds = array<i64: 1, 2, 4, 64>}, {transform_indices = @transform_1, window_bounds = array<i64: 1, 6, 4, 64>}, {transform_indices = @transform_2, window_bounds = array<i64: 1, 6, 256>}, {pipeline_mode = #tpu.pipeline_mode<synchronous>, transform_indices = @transform_3, window_bounds = array<i64: 64, 33>}, {pipeline_mode = #tpu.pipeline_mode<synchronous>, transform_indices = @transform_4, window_bounds = array<i64: 64, 33>}, {transform_indices = @transform_5, window_bounds = array<i64: 1, 2, 3, 256>}]} {
    %c0 = arith.constant 0 : index
    %c0_0 = arith.constant 0 : index
    %c0_1 = arith.constant 0 : index
    %c0_2 = arith.constant 0 : index
    %0 = vector.load %arg1[%c0, %c0_0, %c0_1, %c0_2] : memref<1x2x4x64xf32, #tpu.memory_space<vmem>>, vector<1x2x4x64xf32>
    %1 = vector.shape_cast %0 : vector<1x2x4x64xf32> to vector<2x4x64xf32>
    %c0_3 = arith.constant 0 : index
    %c0_4 = arith.constant 0 : index
    %c0_5 = arith.constant 0 : index
    %c0_6 = arith.constant 0 : index
    %2 = vector.load %arg2[%c0_3, %c0_4, %c0_5, %c0_6] : memref<1x6x4x64xf32, #tpu.memory_space<vmem>>, vector<1x6x4x64xf32>
    %3 = vector.shape_cast %2 : vector<1x6x4x64xf32> to vector<6x4x64xf32>
    %c0_7 = arith.constant 0 : index
    %c0_8 = arith.constant 0 : index
    %c0_9 = arith.constant 0 : index
    %4 = vector.load %arg3[%c0_7, %c0_8, %c0_9] : memref<1x6x256xf32, #tpu.memory_space<vmem>>, vector<1x6x256xf32>
    %5 = vector.shape_cast %4 : vector<1x6x256xf32> to vector<6x256xf32>
    %c0_10 = arith.constant 0 : index
    %c0_11 = arith.constant 0 : index
    %6 = vector.load %arg4[%c0_10, %c0_11] : memref<64x33xf32, #tpu.memory_space<vmem>>, vector<64x33xf32>
    %c0_12 = arith.constant 0 : index
    %c0_13 = arith.constant 0 : index
    %7 = vector.load %arg5[%c0_12, %c0_13] : memref<64x33xf32, #tpu.memory_space<vmem>>, vector<64x33xf32>
    %cst = arith.constant 0.000000e+00 : f32
    %8 = vector.broadcast %cst : f32 to vector<2x33xf32>
    %cst_14 = arith.constant 0.000000e+00 : f32
    %9 = vector.broadcast %cst_14 : f32 to vector<6x33xf32>
    %cst_15 = arith.constant 0.000000e+00 : f32
    %10 = vector.broadcast %cst_15 : f32 to vector<2x6x33xf32>
    %cst_16 = arith.constant 0.000000e+00 : f32
    %11 = vector.broadcast %cst_16 : f32 to vector<2x6x33xf32>
    %12 = vector.extract_strided_slice %1 {offsets = [0, 0, 0], sizes = [2, 1, 64], strides = [1, 1, 1]} : vector<2x4x64xf32> to vector<2x1x64xf32>
    %13 = vector.shape_cast %12 : vector<2x1x64xf32> to vector<2x64xf32>
    %14 = vector.extract_strided_slice %3 {offsets = [0, 0, 0], sizes = [6, 1, 64], strides = [1, 1, 1]} : vector<6x4x64xf32> to vector<6x1x64xf32>
    %15 = vector.shape_cast %14 : vector<6x1x64xf32> to vector<6x64xf32>
    %cst_17 = arith.constant dense<0.000000e+00> : vector<2x33xf32>
    %16 = tpu.matmul %13, %6, %cst_17 {dimension_numbers = #tpu.dot_dimension_numbers<[1], [0], [0], [1], [0, 0, 1, 1], [], []>} : vector<2x64xf32>, vector<64x33xf32>, vector<2x33xf32> -> vector<2x33xf32>
    %cst_18 = arith.constant dense<0.000000e+00> : vector<2x33xf32>
    %17 = tpu.matmul %13, %7, %cst_18 {dimension_numbers = #tpu.dot_dimension_numbers<[1], [0], [0], [1], [0, 0, 1, 1], [], []>} : vector<2x64xf32>, vector<64x33xf32>, vector<2x33xf32> -> vector<2x33xf32>
    %cst_19 = arith.constant dense<0.000000e+00> : vector<6x33xf32>
    %18 = tpu.matmul %15, %6, %cst_19 {dimension_numbers = #tpu.dot_dimension_numbers<[1], [0], [0], [1], [0, 0, 1, 1], [], []>} : vector<6x64xf32>, vector<64x33xf32>, vector<6x33xf32> -> vector<6x33xf32>
    %cst_20 = arith.constant dense<0.000000e+00> : vector<6x33xf32>
    %19 = tpu.matmul %15, %7, %cst_20 {dimension_numbers = #tpu.dot_dimension_numbers<[1], [0], [0], [1], [0, 0, 1, 1], [], []>} : vector<6x64xf32>, vector<64x33xf32>, vector<6x33xf32> -> vector<6x33xf32>
    %20 = arith.mulf %16, %16 : vector<2x33xf32>
    %21 = arith.addf %8, %20 : vector<2x33xf32>
    %22 = arith.mulf %17, %17 : vector<2x33xf32>
    %23 = arith.addf %21, %22 : vector<2x33xf32>
    %24 = arith.mulf %18, %18 : vector<6x33xf32>
    %25 = arith.addf %9, %24 : vector<6x33xf32>
    %26 = arith.mulf %19, %19 : vector<6x33xf32>
    %27 = arith.addf %25, %26 : vector<6x33xf32>
    %28 = vector.shape_cast %16 : vector<2x33xf32> to vector<2x1x33xf32>
    %29 = vector.shape_cast %18 : vector<6x33xf32> to vector<1x6x33xf32>
    %30 = vector.broadcast %28 : vector<2x1x33xf32> to vector<2x6x33xf32>
    %31 = vector.broadcast %29 : vector<1x6x33xf32> to vector<2x6x33xf32>
    %32 = arith.mulf %30, %31 : vector<2x6x33xf32>
    %33 = arith.addf %10, %32 : vector<2x6x33xf32>
    %34 = vector.shape_cast %17 : vector<2x33xf32> to vector<2x1x33xf32>
    %35 = vector.shape_cast %19 : vector<6x33xf32> to vector<1x6x33xf32>
    %36 = vector.broadcast %34 : vector<2x1x33xf32> to vector<2x6x33xf32>
    %37 = vector.broadcast %35 : vector<1x6x33xf32> to vector<2x6x33xf32>
    %38 = arith.mulf %36, %37 : vector<2x6x33xf32>
    %39 = arith.addf %33, %38 : vector<2x6x33xf32>
    %40 = vector.shape_cast %17 : vector<2x33xf32> to vector<2x1x33xf32>
    %41 = vector.shape_cast %18 : vector<6x33xf32> to vector<1x6x33xf32>
    %42 = vector.broadcast %40 : vector<2x1x33xf32> to vector<2x6x33xf32>
    %43 = vector.broadcast %41 : vector<1x6x33xf32> to vector<2x6x33xf32>
    %44 = arith.mulf %42, %43 : vector<2x6x33xf32>
    %45 = arith.addf %11, %44 : vector<2x6x33xf32>
    %46 = vector.shape_cast %16 : vector<2x33xf32> to vector<2x1x33xf32>
    %47 = vector.shape_cast %19 : vector<6x33xf32> to vector<1x6x33xf32>
    %48 = vector.broadcast %46 : vector<2x1x33xf32> to vector<2x6x33xf32>
    %49 = vector.broadcast %47 : vector<1x6x33xf32> to vector<2x6x33xf32>
    %50 = arith.mulf %48, %49 : vector<2x6x33xf32>
    %51 = arith.subf %45, %50 : vector<2x6x33xf32>
    %52 = vector.extract_strided_slice %1 {offsets = [0, 1, 0], sizes = [2, 1, 64], strides = [1, 1, 1]} : vector<2x4x64xf32> to vector<2x1x64xf32>
    %53 = vector.shape_cast %52 : vector<2x1x64xf32> to vector<2x64xf32>
    %54 = vector.extract_strided_slice %3 {offsets = [0, 1, 0], sizes = [6, 1, 64], strides = [1, 1, 1]} : vector<6x4x64xf32> to vector<6x1x64xf32>
    %55 = vector.shape_cast %54 : vector<6x1x64xf32> to vector<6x64xf32>
    %cst_21 = arith.constant dense<0.000000e+00> : vector<2x33xf32>
    %56 = tpu.matmul %53, %6, %cst_21 {dimension_numbers = #tpu.dot_dimension_numbers<[1], [0], [0], [1], [0, 0, 1, 1], [], []>} : vector<2x64xf32>, vector<64x33xf32>, vector<2x33xf32> -> vector<2x33xf32>
    %cst_22 = arith.constant dense<0.000000e+00> : vector<2x33xf32>
    %57 = tpu.matmul %53, %7, %cst_22 {dimension_numbers = #tpu.dot_dimension_numbers<[1], [0], [0], [1], [0, 0, 1, 1], [], []>} : vector<2x64xf32>, vector<64x33xf32>, vector<2x33xf32> -> vector<2x33xf32>
    %cst_23 = arith.constant dense<0.000000e+00> : vector<6x33xf32>
    %58 = tpu.matmul %55, %6, %cst_23 {dimension_numbers = #tpu.dot_dimension_numbers<[1], [0], [0], [1], [0, 0, 1, 1], [], []>} : vector<6x64xf32>, vector<64x33xf32>, vector<6x33xf32> -> vector<6x33xf32>
    %cst_24 = arith.constant dense<0.000000e+00> : vector<6x33xf32>
    %59 = tpu.matmul %55, %7, %cst_24 {dimension_numbers = #tpu.dot_dimension_numbers<[1], [0], [0], [1], [0, 0, 1, 1], [], []>} : vector<6x64xf32>, vector<64x33xf32>, vector<6x33xf32> -> vector<6x33xf32>
    %60 = arith.mulf %56, %56 : vector<2x33xf32>
    %61 = arith.addf %23, %60 : vector<2x33xf32>
    %62 = arith.mulf %57, %57 : vector<2x33xf32>
    %63 = arith.addf %61, %62 : vector<2x33xf32>
    %64 = arith.mulf %58, %58 : vector<6x33xf32>
    %65 = arith.addf %27, %64 : vector<6x33xf32>
    %66 = arith.mulf %59, %59 : vector<6x33xf32>
    %67 = arith.addf %65, %66 : vector<6x33xf32>
    %68 = vector.shape_cast %56 : vector<2x33xf32> to vector<2x1x33xf32>
    %69 = vector.shape_cast %58 : vector<6x33xf32> to vector<1x6x33xf32>
    %70 = vector.broadcast %68 : vector<2x1x33xf32> to vector<2x6x33xf32>
    %71 = vector.broadcast %69 : vector<1x6x33xf32> to vector<2x6x33xf32>
    %72 = arith.mulf %70, %71 : vector<2x6x33xf32>
    %73 = arith.addf %39, %72 : vector<2x6x33xf32>
    %74 = vector.shape_cast %57 : vector<2x33xf32> to vector<2x1x33xf32>
    %75 = vector.shape_cast %59 : vector<6x33xf32> to vector<1x6x33xf32>
    %76 = vector.broadcast %74 : vector<2x1x33xf32> to vector<2x6x33xf32>
    %77 = vector.broadcast %75 : vector<1x6x33xf32> to vector<2x6x33xf32>
    %78 = arith.mulf %76, %77 : vector<2x6x33xf32>
    %79 = arith.addf %73, %78 : vector<2x6x33xf32>
    %80 = vector.shape_cast %57 : vector<2x33xf32> to vector<2x1x33xf32>
    %81 = vector.shape_cast %58 : vector<6x33xf32> to vector<1x6x33xf32>
    %82 = vector.broadcast %80 : vector<2x1x33xf32> to vector<2x6x33xf32>
    %83 = vector.broadcast %81 : vector<1x6x33xf32> to vector<2x6x33xf32>
    %84 = arith.mulf %82, %83 : vector<2x6x33xf32>
    %85 = arith.addf %51, %84 : vector<2x6x33xf32>
    %86 = vector.shape_cast %56 : vector<2x33xf32> to vector<2x1x33xf32>
    %87 = vector.shape_cast %59 : vector<6x33xf32> to vector<1x6x33xf32>
    %88 = vector.broadcast %86 : vector<2x1x33xf32> to vector<2x6x33xf32>
    %89 = vector.broadcast %87 : vector<1x6x33xf32> to vector<2x6x33xf32>
    %90 = arith.mulf %88, %89 : vector<2x6x33xf32>
    %91 = arith.subf %85, %90 : vector<2x6x33xf32>
    %92 = vector.extract_strided_slice %1 {offsets = [0, 2, 0], sizes = [2, 1, 64], strides = [1, 1, 1]} : vector<2x4x64xf32> to vector<2x1x64xf32>
    %93 = vector.shape_cast %92 : vector<2x1x64xf32> to vector<2x64xf32>
    %94 = vector.extract_strided_slice %3 {offsets = [0, 2, 0], sizes = [6, 1, 64], strides = [1, 1, 1]} : vector<6x4x64xf32> to vector<6x1x64xf32>
    %95 = vector.shape_cast %94 : vector<6x1x64xf32> to vector<6x64xf32>
    %cst_25 = arith.constant dense<0.000000e+00> : vector<2x33xf32>
    %96 = tpu.matmul %93, %6, %cst_25 {dimension_numbers = #tpu.dot_dimension_numbers<[1], [0], [0], [1], [0, 0, 1, 1], [], []>} : vector<2x64xf32>, vector<64x33xf32>, vector<2x33xf32> -> vector<2x33xf32>
    %cst_26 = arith.constant dense<0.000000e+00> : vector<2x33xf32>
    %97 = tpu.matmul %93, %7, %cst_26 {dimension_numbers = #tpu.dot_dimension_numbers<[1], [0], [0], [1], [0, 0, 1, 1], [], []>} : vector<2x64xf32>, vector<64x33xf32>, vector<2x33xf32> -> vector<2x33xf32>
    %cst_27 = arith.constant dense<0.000000e+00> : vector<6x33xf32>
    %98 = tpu.matmul %95, %6, %cst_27 {dimension_numbers = #tpu.dot_dimension_numbers<[1], [0], [0], [1], [0, 0, 1, 1], [], []>} : vector<6x64xf32>, vector<64x33xf32>, vector<6x33xf32> -> vector<6x33xf32>
    %cst_28 = arith.constant dense<0.000000e+00> : vector<6x33xf32>
    %99 = tpu.matmul %95, %7, %cst_28 {dimension_numbers = #tpu.dot_dimension_numbers<[1], [0], [0], [1], [0, 0, 1, 1], [], []>} : vector<6x64xf32>, vector<64x33xf32>, vector<6x33xf32> -> vector<6x33xf32>
    %100 = arith.mulf %96, %96 : vector<2x33xf32>
    %101 = arith.addf %63, %100 : vector<2x33xf32>
    %102 = arith.mulf %97, %97 : vector<2x33xf32>
    %103 = arith.addf %101, %102 : vector<2x33xf32>
    %104 = arith.mulf %98, %98 : vector<6x33xf32>
    %105 = arith.addf %67, %104 : vector<6x33xf32>
    %106 = arith.mulf %99, %99 : vector<6x33xf32>
    %107 = arith.addf %105, %106 : vector<6x33xf32>
    %108 = vector.shape_cast %96 : vector<2x33xf32> to vector<2x1x33xf32>
    %109 = vector.shape_cast %98 : vector<6x33xf32> to vector<1x6x33xf32>
    %110 = vector.broadcast %108 : vector<2x1x33xf32> to vector<2x6x33xf32>
    %111 = vector.broadcast %109 : vector<1x6x33xf32> to vector<2x6x33xf32>
    %112 = arith.mulf %110, %111 : vector<2x6x33xf32>
    %113 = arith.addf %79, %112 : vector<2x6x33xf32>
    %114 = vector.shape_cast %97 : vector<2x33xf32> to vector<2x1x33xf32>
    %115 = vector.shape_cast %99 : vector<6x33xf32> to vector<1x6x33xf32>
    %116 = vector.broadcast %114 : vector<2x1x33xf32> to vector<2x6x33xf32>
    %117 = vector.broadcast %115 : vector<1x6x33xf32> to vector<2x6x33xf32>
    %118 = arith.mulf %116, %117 : vector<2x6x33xf32>
    %119 = arith.addf %113, %118 : vector<2x6x33xf32>
    %120 = vector.shape_cast %97 : vector<2x33xf32> to vector<2x1x33xf32>
    %121 = vector.shape_cast %98 : vector<6x33xf32> to vector<1x6x33xf32>
    %122 = vector.broadcast %120 : vector<2x1x33xf32> to vector<2x6x33xf32>
    %123 = vector.broadcast %121 : vector<1x6x33xf32> to vector<2x6x33xf32>
    %124 = arith.mulf %122, %123 : vector<2x6x33xf32>
    %125 = arith.addf %91, %124 : vector<2x6x33xf32>
    %126 = vector.shape_cast %96 : vector<2x33xf32> to vector<2x1x33xf32>
    %127 = vector.shape_cast %99 : vector<6x33xf32> to vector<1x6x33xf32>
    %128 = vector.broadcast %126 : vector<2x1x33xf32> to vector<2x6x33xf32>
    %129 = vector.broadcast %127 : vector<1x6x33xf32> to vector<2x6x33xf32>
    %130 = arith.mulf %128, %129 : vector<2x6x33xf32>
    %131 = arith.subf %125, %130 : vector<2x6x33xf32>
    %132 = vector.extract_strided_slice %1 {offsets = [0, 3, 0], sizes = [2, 1, 64], strides = [1, 1, 1]} : vector<2x4x64xf32> to vector<2x1x64xf32>
    %133 = vector.shape_cast %132 : vector<2x1x64xf32> to vector<2x64xf32>
    %134 = vector.extract_strided_slice %3 {offsets = [0, 3, 0], sizes = [6, 1, 64], strides = [1, 1, 1]} : vector<6x4x64xf32> to vector<6x1x64xf32>
    %135 = vector.shape_cast %134 : vector<6x1x64xf32> to vector<6x64xf32>
    %cst_29 = arith.constant dense<0.000000e+00> : vector<2x33xf32>
    %136 = tpu.matmul %133, %6, %cst_29 {dimension_numbers = #tpu.dot_dimension_numbers<[1], [0], [0], [1], [0, 0, 1, 1], [], []>} : vector<2x64xf32>, vector<64x33xf32>, vector<2x33xf32> -> vector<2x33xf32>
    %cst_30 = arith.constant dense<0.000000e+00> : vector<2x33xf32>
    %137 = tpu.matmul %133, %7, %cst_30 {dimension_numbers = #tpu.dot_dimension_numbers<[1], [0], [0], [1], [0, 0, 1, 1], [], []>} : vector<2x64xf32>, vector<64x33xf32>, vector<2x33xf32> -> vector<2x33xf32>
    %cst_31 = arith.constant dense<0.000000e+00> : vector<6x33xf32>
    %138 = tpu.matmul %135, %6, %cst_31 {dimension_numbers = #tpu.dot_dimension_numbers<[1], [0], [0], [1], [0, 0, 1, 1], [], []>} : vector<6x64xf32>, vector<64x33xf32>, vector<6x33xf32> -> vector<6x33xf32>
    %cst_32 = arith.constant dense<0.000000e+00> : vector<6x33xf32>
    %139 = tpu.matmul %135, %7, %cst_32 {dimension_numbers = #tpu.dot_dimension_numbers<[1], [0], [0], [1], [0, 0, 1, 1], [], []>} : vector<6x64xf32>, vector<64x33xf32>, vector<6x33xf32> -> vector<6x33xf32>
    %140 = arith.mulf %136, %136 : vector<2x33xf32>
    %141 = arith.addf %103, %140 : vector<2x33xf32>
    %142 = arith.mulf %137, %137 : vector<2x33xf32>
    %143 = arith.addf %141, %142 : vector<2x33xf32>
    %144 = arith.mulf %138, %138 : vector<6x33xf32>
    %145 = arith.addf %107, %144 : vector<6x33xf32>
    %146 = arith.mulf %139, %139 : vector<6x33xf32>
    %147 = arith.addf %145, %146 : vector<6x33xf32>
    %148 = vector.shape_cast %136 : vector<2x33xf32> to vector<2x1x33xf32>
    %149 = vector.shape_cast %138 : vector<6x33xf32> to vector<1x6x33xf32>
    %150 = vector.broadcast %148 : vector<2x1x33xf32> to vector<2x6x33xf32>
    %151 = vector.broadcast %149 : vector<1x6x33xf32> to vector<2x6x33xf32>
    %152 = arith.mulf %150, %151 : vector<2x6x33xf32>
    %153 = arith.addf %119, %152 : vector<2x6x33xf32>
    %154 = vector.shape_cast %137 : vector<2x33xf32> to vector<2x1x33xf32>
    %155 = vector.shape_cast %139 : vector<6x33xf32> to vector<1x6x33xf32>
    %156 = vector.broadcast %154 : vector<2x1x33xf32> to vector<2x6x33xf32>
    %157 = vector.broadcast %155 : vector<1x6x33xf32> to vector<2x6x33xf32>
    %158 = arith.mulf %156, %157 : vector<2x6x33xf32>
    %159 = arith.addf %153, %158 : vector<2x6x33xf32>
    %160 = vector.shape_cast %137 : vector<2x33xf32> to vector<2x1x33xf32>
    %161 = vector.shape_cast %138 : vector<6x33xf32> to vector<1x6x33xf32>
    %162 = vector.broadcast %160 : vector<2x1x33xf32> to vector<2x6x33xf32>
    %163 = vector.broadcast %161 : vector<1x6x33xf32> to vector<2x6x33xf32>
    %164 = arith.mulf %162, %163 : vector<2x6x33xf32>
    %165 = arith.addf %131, %164 : vector<2x6x33xf32>
    %166 = vector.shape_cast %136 : vector<2x33xf32> to vector<2x1x33xf32>
    %167 = vector.shape_cast %139 : vector<6x33xf32> to vector<1x6x33xf32>
    %168 = vector.broadcast %166 : vector<2x1x33xf32> to vector<2x6x33xf32>
    %169 = vector.broadcast %167 : vector<1x6x33xf32> to vector<2x6x33xf32>
    %170 = arith.mulf %168, %169 : vector<2x6x33xf32>
    %171 = arith.subf %165, %170 : vector<2x6x33xf32>
    %172 = vector.shape_cast %143 : vector<2x33xf32> to vector<2x1x33xf32>
    %173 = vector.shape_cast %147 : vector<6x33xf32> to vector<1x6x33xf32>
    %174 = vector.broadcast %172 : vector<2x1x33xf32> to vector<2x6x33xf32>
    %175 = vector.broadcast %173 : vector<1x6x33xf32> to vector<2x6x33xf32>
    %176 = arith.mulf %174, %175 : vector<2x6x33xf32>
    %cst_33 = arith.constant 9.99999996E-13 : f32
    %177 = vector.broadcast %cst_33 : f32 to vector<2x6x33xf32>
    %178 = arith.addf %176, %177 : vector<2x6x33xf32>
    %179 = arith.mulf %159, %159 : vector<2x6x33xf32>
    %180 = arith.mulf %171, %171 : vector<2x6x33xf32>
    %181 = arith.addf %179, %180 : vector<2x6x33xf32>
    %182 = arith.divf %181, %178 : vector<2x6x33xf32>
    %cst_34 = arith.constant dense<0.000000e+00> : vector<2x6xf32>
    %183 = vector.multi_reduction <add>, %182, %cst_34 [2] : vector<2x6x33xf32> to vector<2x6xf32>
    %cst_35 = arith.constant 3.300000e+01 : f32
    %184 = vector.broadcast %cst_35 : f32 to vector<2x6xf32>
    %185 = arith.divf %183, %184 : vector<2x6xf32>
    %186 = tpu.iota {dimensions = array<i32: 1>} : vector<2x6xi32>
    %cst_36 = arith.constant dense<0xFF800000> : vector<2xf32>
    %187 = vector.multi_reduction <maximumf>, %185, %cst_36 [1] : vector<2x6xf32> to vector<2xf32>
    %188 = vector.shape_cast %187 : vector<2xf32> to vector<2x1xf32>
    %189 = vector.broadcast %188 : vector<2x1xf32> to vector<2x6xf32>
    %190 = arith.cmpf oeq, %185, %189 : vector<2x6xf32>
    %c6_i32 = arith.constant 6 : i32
    %191 = vector.broadcast %c6_i32 : i32 to vector<2x6xi32>
    %192 = arith.select %190, %186, %191 : vector<2x6xi1>, vector<2x6xi32>
    %cst_37 = arith.constant dense<2147483647> : vector<2xi32>
    %193 = vector.multi_reduction <minsi>, %192, %cst_37 [1] : vector<2x6xi32> to vector<2xi32>
    %194 = vector.shape_cast %193 : vector<2xi32> to vector<2x1xi32>
    %195 = vector.broadcast %194 : vector<2x1xi32> to vector<2x6xi32>
    %196 = arith.cmpi eq, %186, %195 : vector<2x6xi32>
    %197 = arith.extui %196 : vector<2x6xi1> to vector<2x6xi32>
    %198 = arith.sitofp %197 : vector<2x6xi32> to vector<2x6xf32>
    %cst_38 = arith.constant dense<0.000000e+00> : vector<2x256xf32>
    %199 = tpu.matmul %198, %5, %cst_38 {dimension_numbers = #tpu.dot_dimension_numbers<[1], [0], [0], [1], [0, 0, 1, 1], [], []>} : vector<2x6xf32>, vector<6x256xf32>, vector<2x256xf32> -> vector<2x256xf32>
    %c0_39 = arith.constant 0 : index
    %c0_40 = arith.constant 0 : index
    %c0_41 = arith.constant 0 : index
    %c0_42 = arith.constant 0 : index
    %200 = vector.load %arg6[%c0_39, %c0_40, %c0_41, %c0_42] : memref<1x2x3x256xf32, #tpu.memory_space<vmem>>, vector<1x2x1x256xf32>
    %201 = vector.shape_cast %200 : vector<1x2x1x256xf32> to vector<2x256xf32>
    %202 = vector.shape_cast %199 : vector<2x256xf32> to vector<1x2x1x256xf32>
    tpu.vector_store %arg6[%c0_39, %c0_40, %c0_41, %c0_42], %202 {strides = array<i32>} : memref<1x2x3x256xf32, #tpu.memory_space<vmem>>, vector<1x2x1x256xf32>,
    %cst_43 = arith.constant 0xFF800000 : f32
    %203 = vector.broadcast %cst_43 : f32 to vector<2x6xf32>
    %204 = arith.select %196, %203, %185 : vector<2x6xi1>, vector<2x6xf32>
    %cst_44 = arith.constant dense<0xFF800000> : vector<2xf32>
    %205 = vector.multi_reduction <maximumf>, %204, %cst_44 [1] : vector<2x6xf32> to vector<2xf32>
    %206 = vector.shape_cast %205 : vector<2xf32> to vector<2x1xf32>
    %207 = vector.broadcast %206 : vector<2x1xf32> to vector<2x6xf32>
    %208 = arith.cmpf oeq, %204, %207 : vector<2x6xf32>
    %c6_i32_45 = arith.constant 6 : i32
    %209 = vector.broadcast %c6_i32_45 : i32 to vector<2x6xi32>
    %210 = arith.select %208, %186, %209 : vector<2x6xi1>, vector<2x6xi32>
    %cst_46 = arith.constant dense<2147483647> : vector<2xi32>
    %211 = vector.multi_reduction <minsi>, %210, %cst_46 [1] : vector<2x6xi32> to vector<2xi32>
    %212 = vector.shape_cast %211 : vector<2xi32> to vector<2x1xi32>
    %213 = vector.broadcast %212 : vector<2x1xi32> to vector<2x6xi32>
    %214 = arith.cmpi eq, %186, %213 : vector<2x6xi32>
    %215 = arith.extui %214 : vector<2x6xi1> to vector<2x6xi32>
    %216 = arith.sitofp %215 : vector<2x6xi32> to vector<2x6xf32>
    %cst_47 = arith.constant dense<0.000000e+00> : vector<2x256xf32>
    %217 = tpu.matmul %216, %5, %cst_47 {dimension_numbers = #tpu.dot_dimension_numbers<[1], [0], [0], [1], [0, 0, 1, 1], [], []>} : vector<2x6xf32>, vector<6x256xf32>, vector<2x256xf32> -> vector<2x256xf32>
    %c0_48 = arith.constant 0 : index
    %c0_49 = arith.constant 0 : index
    %c1 = arith.constant 1 : index
    %c0_50 = arith.constant 0 : index
    %218 = vector.load %arg6[%c0_48, %c0_49, %c1, %c0_50] : memref<1x2x3x256xf32, #tpu.memory_space<vmem>>, vector<1x2x1x256xf32>
    %219 = vector.shape_cast %218 : vector<1x2x1x256xf32> to vector<2x256xf32>
    %220 = vector.shape_cast %217 : vector<2x256xf32> to vector<1x2x1x256xf32>
    tpu.vector_store %arg6[%c0_48, %c0_49, %c1, %c0_50], %220 {strides = array<i32>} : memref<1x2x3x256xf32, #tpu.memory_space<vmem>>, vector<1x2x1x256xf32>,
    %cst_51 = arith.constant 0xFF800000 : f32
    %221 = vector.broadcast %cst_51 : f32 to vector<2x6xf32>
    %222 = arith.select %214, %221, %204 : vector<2x6xi1>, vector<2x6xf32>
    %cst_52 = arith.constant dense<0xFF800000> : vector<2xf32>
    %223 = vector.multi_reduction <maximumf>, %222, %cst_52 [1] : vector<2x6xf32> to vector<2xf32>
    %224 = vector.shape_cast %223 : vector<2xf32> to vector<2x1xf32>
    %225 = vector.broadcast %224 : vector<2x1xf32> to vector<2x6xf32>
    %226 = arith.cmpf oeq, %222, %225 : vector<2x6xf32>
    %c6_i32_53 = arith.constant 6 : i32
    %227 = vector.broadcast %c6_i32_53 : i32 to vector<2x6xi32>
    %228 = arith.select %226, %186, %227 : vector<2x6xi1>, vector<2x6xi32>
    %cst_54 = arith.constant dense<2147483647> : vector<2xi32>
    %229 = vector.multi_reduction <minsi>, %228, %cst_54 [1] : vector<2x6xi32> to vector<2xi32>
    %230 = vector.shape_cast %229 : vector<2xi32> to vector<2x1xi32>
    %231 = vector.broadcast %230 : vector<2x1xi32> to vector<2x6xi32>
    %232 = arith.cmpi eq, %186, %231 : vector<2x6xi32>
    %233 = arith.extui %232 : vector<2x6xi1> to vector<2x6xi32>
    %234 = arith.sitofp %233 : vector<2x6xi32> to vector<2x6xf32>
    %cst_55 = arith.constant dense<0.000000e+00> : vector<2x256xf32>
    %235 = tpu.matmul %234, %5, %cst_55 {dimension_numbers = #tpu.dot_dimension_numbers<[1], [0], [0], [1], [0, 0, 1, 1], [], []>} : vector<2x6xf32>, vector<6x256xf32>, vector<2x256xf32> -> vector<2x256xf32>
    %c0_56 = arith.constant 0 : index
    %c0_57 = arith.constant 0 : index
    %c2 = arith.constant 2 : index
    %c0_58 = arith.constant 0 : index
    %236 = vector.load %arg6[%c0_56, %c0_57, %c2, %c0_58] : memref<1x2x3x256xf32, #tpu.memory_space<vmem>>, vector<1x2x1x256xf32>
    %237 = vector.shape_cast %236 : vector<1x2x1x256xf32> to vector<2x256xf32>
    %238 = vector.shape_cast %235 : vector<2x256xf32> to vector<1x2x1x256xf32>
    tpu.vector_store %arg6[%c0_56, %c0_57, %c2, %c0_58], %238 {strides = array<i32>} : memref<1x2x3x256xf32, #tpu.memory_space<vmem>>, vector<1x2x1x256xf32>,
    return
  }
  func.func @transform_0(%arg0: i32) -> (i32, i32, i32, i32) {
    %c0_i32 = arith.constant 0 : i32
    %c0_i32_0 = arith.constant 0 : i32
    %c0_i32_1 = arith.constant 0 : i32
    %c0_i32_2 = arith.constant 0 : i32
    return %arg0, %c0_i32, %c0_i32_0, %c0_i32_1 : i32, i32, i32, i32
  }
  func.func @transform_1(%arg0: i32) -> (i32, i32, i32, i32) {
    %c0_i32 = arith.constant 0 : i32
    %c0_i32_0 = arith.constant 0 : i32
    %c0_i32_1 = arith.constant 0 : i32
    %c0_i32_2 = arith.constant 0 : i32
    return %arg0, %c0_i32, %c0_i32_0, %c0_i32_1 : i32, i32, i32, i32
  }
  func.func @transform_2(%arg0: i32) -> (i32, i32, i32) {
    %c0_i32 = arith.constant 0 : i32
    %c0_i32_0 = arith.constant 0 : i32
    %c0_i32_1 = arith.constant 0 : i32
    return %arg0, %c0_i32, %c0_i32_0 : i32, i32, i32
  }
  func.func @transform_3(%arg0: i32) -> (i32, i32) {
    %c0_i32 = arith.constant 0 : i32
    %c0_i32_0 = arith.constant 0 : i32
    %c0_i32_1 = arith.constant 0 : i32
    return %c0_i32, %c0_i32_0 : i32, i32
  }
  func.func @transform_4(%arg0: i32) -> (i32, i32) {
    %c0_i32 = arith.constant 0 : i32
    %c0_i32_0 = arith.constant 0 : i32
    %c0_i32_1 = arith.constant 0 : i32
    return %c0_i32, %c0_i32_0 : i32, i32
  }
  func.func @transform_5(%arg0: i32) -> (i32, i32, i32, i32) {
    %c0_i32 = arith.constant 0 : i32
    %c0_i32_0 = arith.constant 0 : i32
    %c0_i32_1 = arith.constant 0 : i32
    %c0_i32_2 = arith.constant 0 : i32
    return %arg0, %c0_i32, %c0_i32_0, %c0_i32_1 : i32, i32, i32, i32
  }
}

</mosaic_0001>

<llo_original>
// kernel: tpu_custom_call.1
$region0: #{tpu_custom_call.1}
  #allocation0 [shape = 'u32[]', space=smem, size = 0x4, offset = 0x4, fixed_abs, tag = 'smem constant byte address 0x4 - core index']
  #allocation1 [shape = 'u32[144,128]{1,0:T(1,128)}', space=vmem, size = 0x12000, scoped, tag = 'internal scratch']
  %s0 = inlined_call_operand.vmem [shape: f32[2,2,4,64], index: 0, kind: input, shape index: {}]
  %s1 = inlined_call_operand.vmem [shape: f32[2,6,4,64], index: 1, kind: input, shape index: {}]
  %s2 = inlined_call_operand.vmem [shape: f32[2,6,256], index: 2, kind: input, shape index: {}]
  %s3 = inlined_call_operand.vmem [shape: f32[64,33], index: 3, kind: input, shape index: {}]
  %s4 = inlined_call_operand.vmem [shape: f32[64,33], index: 4, kind: input, shape index: {}]
  %s5 = inlined_call_operand.vmem [shape: f32[2,2,3,256], index: 5, kind: output, shape index: {}]
  %s6 = sld [smem:[#allocation0]]
  $region53: #{tpu_custom_call.1} parent=0
    _
  %s8 = ssub.s32 1, %s6
  %s9 = scalar_select 0, %s8, %s6
  loop: start=0, step=1, limit=4
  $region2: #{tpu_custom_call.1} parent=0 // loop_pre_header
    _
  $region3: #{tpu_custom_call.1} parent=0 // loop_header
    %s11 = sphi 0, %s15
    %p12 = scmp.ge.s32.totalorder %s11, 4
    %s21 = sphi 0, %s23
    %s24 = sphi 0, %s21
    %s25 = sphi 0, %s24
    %s41 = sphi 0, %s25
    %s47 = sphi 0, %s49
    %s50 = sphi 0, %s47
    %s51 = sphi 0, %s50
    %s67 = sphi 0, %s51
    %s73 = sphi 0, %s75
    %s76 = sphi 0, %s73
    %s77 = sphi 0, %s76
    %s93 = sphi 0, %s77
    %s97 = sphi 0, %s97
    %s99 = sphi 0, %s97
    %s100 = sphi 0, %s99
    %s114 = sphi 0, %s100
    %s118 = sphi 0, %s118
    %s120 = sphi 0, %s118
    %s121 = sphi 0, %s120
    %s135 = sphi 0, %s121
    %s141 = sphi 0, %s143
    %s144 = sphi 0, %s141
    %s145 = sphi 0, %s144
    %s161 = sphi 0, %s145
  $region4: #{tpu_custom_call.1} parent=0 // loop_header_branch
    %14 = sbr.rel (%p12) target = $region8
  $region5: #{tpu_custom_call.1} parent=0 // loop_body
    %s16 = ssub.s32 %s11, 1
    %s17 = ssub.s32 %s11, 2
    %s18 = sadd.s32 %s11, 1
    %s19 = ssub.s32 %s11, %s18
    %p20 = scmp.eq.s32.totalorder %s19, 0
    %s22 = sadd.s32 %s21, 1
    %s23 = scalar_select %p20, %s21, %s22
    %p26 = pneg %p20
    %p27 = scmp.eq.s32.totalorder %s11, 1
    %p28 = por %p26, %p27
    %p29 = scmp.ne.s32.totalorder %s21, %s24
    %p30 = scmp.eq.s32.totalorder %s11, 0
    %p31 = por %p29, %p30
    %p32 = scmp.ne.s32.totalorder %s21, %s24
    %p33 = scmp.eq.s32.totalorder %s16, 1
    %p34 = por %p32, %p33
    %p35 = scmp.ne.s32.totalorder %s24, %s25
    %p36 = scmp.eq.s32.totalorder %s16, 0
    %p37 = por %p35, %p36
    %p38 = scmp.ne.s32.totalorder %s24, %s25
    %p39 = scmp.eq.s32.totalorder %s17, 1
    %p40 = por %p38, %p39
    %p42 = scmp.ne.s32.totalorder %s25, %s41
    %p43 = scmp.eq.s32.totalorder %s17, 0
    %p44 = por %p42, %p43
    %s45 = ssub.s32 %s11, %s18
    %p46 = scmp.eq.s32.totalorder %s45, 0
    %s48 = sadd.s32 %s47, 1
    %s49 = scalar_select %p46, %s47, %s48
    %p52 = pneg %p46
    %p53 = scmp.eq.s32.totalorder %s11, 1
    %p54 = por %p52, %p53
    %p55 = scmp.ne.s32.totalorder %s47, %s50
    %p56 = scmp.eq.s32.totalorder %s11, 0
    %p57 = por %p55, %p56
    %p58 = scmp.ne.s32.totalorder %s47, %s50
    %p59 = scmp.eq.s32.totalorder %s16, 1
    %p60 = por %p58, %p59
    %p61 = scmp.ne.s32.totalorder %s50, %s51
    %p62 = scmp.eq.s32.totalorder %s16, 0
    %p63 = por %p61, %p62
    %p64 = scmp.ne.s32.totalorder %s50, %s51
    %p65 = scmp.eq.s32.totalorder %s17, 1
    %p66 = por %p64, %p65
    %p68 = scmp.ne.s32.totalorder %s51, %s67
    %p69 = scmp.eq.s32.totalorder %s17, 0
    %p70 = por %p68, %p69
    %s71 = ssub.s32 %s11, %s18
    %p72 = scmp.eq.s32.totalorder %s71, 0
    %s74 = sadd.s32 %s73, 1
    %s75 = scalar_select %p72, %s73, %s74
    %p78 = pneg %p72
    %p79 = scmp.eq.s32.totalorder %s11, 1
    %p80 = por %p78, %p79
    %p81 = scmp.ne.s32.totalorder %s73, %s76
    %p82 = scmp.eq.s32.totalorder %s11, 0
    %p83 = por %p81, %p82
    %p84 = scmp.ne.s32.totalorder %s73, %s76
    %p85 = scmp.eq.s32.totalorder %s16, 1
    %p86 = por %p84, %p85
    %p87 = scmp.ne.s32.totalorder %s76, %s77
    %p88 = scmp.eq.s32.totalorder %s16, 0
    %p89 = por %p87, %p88
    %p90 = scmp.ne.s32.totalorder %s76, %s77
    %p91 = scmp.eq.s32.totalorder %s17, 1
    %p92 = por %p90, %p91
    %p94 = scmp.ne.s32.totalorder %s77, %s93
    %p95 = scmp.eq.s32.totalorder %s17, 0
    %p96 = por %p94, %p95
    %s98 = sadd.s32 %s97, 1
    %p101 = scmp.eq.s32.totalorder %s11, 1
    %p102 = scmp.ne.s32.totalorder %s97, %s99
    %p103 = scmp.eq.s32.totalorder %s11, 0
    %p104 = por %p102, %p103
    %p105 = scmp.ne.s32.totalorder %s97, %s99
    %p106 = scmp.eq.s32.totalorder %s16, 1
    %p107 = por %p105, %p106
    %p108 = scmp.ne.s32.totalorder %s99, %s100
    %p109 = scmp.eq.s32.totalorder %s16, 0
    %p110 = por %p108, %p109
    %p111 = scmp.ne.s32.totalorder %s99, %s100
    %p112 = scmp.eq.s32.totalorder %s17, 1
    %p113 = por %p111, %p112
    %p115 = scmp.ne.s32.totalorder %s100, %s114
    %p116 = scmp.eq.s32.totalorder %s17, 0
    %p117 = por %p115, %p116
    %s119 = sadd.s32 %s118, 1
    %p122 = scmp.eq.s32.totalorder %s11, 1
    %p123 = scmp.ne.s32.totalorder %s118, %s120
    %p124 = scmp.eq.s32.totalorder %s11, 0
    %p125 = por %p123, %p124
    %p126 = scmp.ne.s32.totalorder %s118, %s120
    %p127 = scmp.eq.s32.totalorder %s16, 1
    %p128 = por %p126, %p127
    %p129 = scmp.ne.s32.totalorder %s120, %s121
    %p130 = scmp.eq.s32.totalorder %s16, 0
    %p131 = por %p129, %p130
    %p132 = scmp.ne.s32.totalorder %s120, %s121
    %p133 = scmp.eq.s32.totalorder %s17, 1
    %p134 = por %p132, %p133
    %p136 = scmp.ne.s32.totalorder %s121, %s135
    %p137 = scmp.eq.s32.totalorder %s17, 0
    %p138 = por %p136, %p137
    %s139 = ssub.s32 %s11, %s18
    %p140 = scmp.eq.s32.totalorder %s139, 0
    %s142 = sadd.s32 %s141, 1
    %s143 = scalar_select %p140, %s141, %s142
    %p146 = pneg %p140
    %p147 = scmp.eq.s32.totalorder %s11, 1
    %p148 = por %p146, %p147
    %p149 = scmp.ne.s32.totalorder %s141, %s144
    %p150 = scmp.eq.s32.totalorder %s11, 0
    %p151 = por %p149, %p150
    %p152 = scmp.ne.s32.totalorder %s141, %s144
    %p153 = scmp.eq.s32.totalorder %s16, 1
    %p154 = por %p152, %p153
    %p155 = scmp.ne.s32.totalorder %s144, %s145
    %p156 = scmp.eq.s32.totalorder %s16, 0
    %p157 = por %p155, %p156
    %p158 = scmp.ne.s32.totalorder %s144, %s145
    %p159 = scmp.eq.s32.totalorder %s17, 1
    %p160 = por %p158, %p159
    %p162 = scmp.ne.s32.totalorder %s145, %s161
    %p163 = scmp.eq.s32.totalorder %s17, 0
    %p164 = por %p162, %p163
    %p165 = scmp.le.s32.totalorder 1, %s11
    %p166 = scmp.lt.s32.totalorder %s11, 3
    %p167 = pnand %p165, %p166
    %p168 = pneg %p167
    // Predicated region
    $region9: #{tpu_custom_call.1} parent=5 // pred_check
      _
    $region10: #{tpu_custom_call.1} parent=5 // pred_check_branch
      %170 = sbr.rel (%p167) target = $region12
    $region11: #{tpu_custom_call.1} parent=5 // pred_region
      %s171 = ssub.s32 %s11, 1
      // Predicated region
      $region13: #{tpu_custom_call.1} parent=11 // pred_check
        %p172 = pneg %p110
      $region14: #{tpu_custom_call.1} parent=11 // pred_check_branch
        %174 = sbr.rel (%p172) target = $region16
      $region15: #{tpu_custom_call.1} parent=11 // pred_region
        _
      $region16: #{tpu_custom_call.1} parent=11 // pred_fallthru
        _
      // Predicated region
      $region17: #{tpu_custom_call.1} parent=11 // pred_check
        %p175 = pneg %p131
      $region18: #{tpu_custom_call.1} parent=11 // pred_check_branch
        %177 = sbr.rel (%p175) target = $region20
      $region19: #{tpu_custom_call.1} parent=11 // pred_region
        _
      $region20: #{tpu_custom_call.1} parent=11 // pred_fallthru
        _
    $region12: #{tpu_custom_call.1} parent=5 // pred_fallthru
      _
    %p178 = scmp.lt.s32.totalorder %s11, 2
    // Predicated region
    $region21: #{tpu_custom_call.1} parent=5 // pred_check
      %p179 = pneg %p178
    $region22: #{tpu_custom_call.1} parent=5 // pred_check_branch
      %181 = sbr.rel (%p179) target = $region24
    $region23: #{tpu_custom_call.1} parent=5 // pred_region
      // Predicated region
      $region25: #{tpu_custom_call.1} parent=23 // pred_check
        %p182 = pneg %p31
      $region26: #{tpu_custom_call.1} parent=23 // pred_check_branch
        %184 = sbr.rel (%p182) target = $region28
      $region27: #{tpu_custom_call.1} parent=23 // pred_region
        %p185 = scmp.lt.s32.totalorder %s11, 1
        %s186 = scalar_select %p185, %s11, 1
        %s187 = smul.addr %s186, 2
        %s188 = smul.addr %s187, 4
        %s189 = scalar_lea.vmem %s0, %s188
      $region28: #{tpu_custom_call.1} parent=23 // pred_fallthru
        _
      // Predicated region
      $region29: #{tpu_custom_call.1} parent=23 // pred_check
        %p190 = pneg %p57
      $region30: #{tpu_custom_call.1} parent=23 // pred_check_branch
        %192 = sbr.rel (%p190) target = $region32
      $region31: #{tpu_custom_call.1} parent=23 // pred_region
        %p193 = scmp.lt.s32.totalorder %s11, 1
        %s194 = scalar_select %p193, %s11, 1
        %s195 = smul.addr %s194, 6
        %s196 = smul.addr %s195, 4
        %s197 = scalar_lea.vmem %s1, %s196
      $region32: #{tpu_custom_call.1} parent=23 // pred_fallthru
        _
      // Predicated region
      $region33: #{tpu_custom_call.1} parent=23 // pred_check
        %p198 = pneg %p83
      $region34: #{tpu_custom_call.1} parent=23 // pred_check_branch
        %200 = sbr.rel (%p198) target = $region36
      $region35: #{tpu_custom_call.1} parent=23 // pred_region
        %p201 = scmp.lt.s32.totalorder %s11, 1
        %s202 = scalar_select %p201, %s11, 1
        %s203 = smul.addr %s202, 2
        %s204 = smul.addr %s203, 8
        %s205 = scalar_lea.vmem %s2, %s204
      $region36: #{tpu_custom_call.1} parent=23 // pred_fallthru
        _
    $region24: #{tpu_custom_call.1} parent=5 // pred_fallthru
      _
    %p206 = scmp.le.s32.totalorder 1, %s11
    %p207 = scmp.lt.s32.totalorder %s11, 3
    %p208 = pnand %p206, %p207
    %p209 = pneg %p208
    // Predicated region
    $region37: #{tpu_custom_call.1} parent=5 // pred_check
      _
    $region38: #{tpu_custom_call.1} parent=5 // pred_check_branch
      %211 = sbr.rel (%p208) target = $region40
    $region39: #{tpu_custom_call.1} parent=5 // pred_region
      %s212 = ssub.s32 %s11, 1
      %p213 = scmp.lt.s32.totalorder %s16, 1
      %s214 = scalar_select %p213, %s16, 1
      %s215 = smul.addr %s214, 2
      %s216 = smul.addr %s215, 4
      %s217 = scalar_lea.vmem %s0, %s216
      %p218 = pneg %p37
      %p219 = pneg %p34
      %p220 = scmp.lt.s32.totalorder %s16, 1
      %s221 = scalar_select %p220, %s16, 1
      %s222 = smul.addr %s221, 6
      %s223 = smul.addr %s222, 4
      %s224 = scalar_lea.vmem %s1, %s223
      %p225 = pneg %p63
      %p226 = pneg %p60
      %p227 = scmp.lt.s32.totalorder %s16, 1
      %s228 = scalar_select %p227, %s16, 1
      %s229 = smul.addr %s228, 2
      %s230 = smul.addr %s229, 8
      %s231 = scalar_lea.vmem %s2, %s230
      %p232 = pneg %p89
      %p233 = pneg %p86
      %p234 = pneg %p110
      %p235 = pneg %p107
      %p236 = pneg %p131
      %p237 = pneg %p128
      %p238 = pneg %p157
      %p239 = pneg %p154
      %p240 = scmp.lt.s32.totalorder %s16, 1
      %s241 = scalar_select %p240, %s16, 1
      %s242 = smul.addr %s241, 4
      %s243 = smul.addr %s242, 4
      %s244 = scalar_lea.vmem %s5, %s243
      %p245 = scmp.lt.s32.totalorder %s16, 1
      %s246 = scalar_select %p245, %s16, 1
      %s247 = smul.addr %s246, 2
      %s248 = smul.addr %s247, 4
      %s249 = scalar_lea.vmem %s0, %s248
      %p250 = scmp.lt.s32.totalorder %s16, 1
      %s251 = scalar_select %p250, %s16, 1
      %s252 = smul.addr %s251, 6
      %s253 = smul.addr %s252, 4
      %s254 = scalar_lea.vmem %s1, %s253
      %p255 = scmp.lt.s32.totalorder %s16, 1
      %s256 = scalar_select %p255, %s16, 1
      %s257 = smul.addr %s256, 2
      %s258 = smul.addr %s257, 8
      %s259 = scalar_lea.vmem %s2, %s258
      %p260 = scmp.lt.s32.totalorder %s16, 1
      %s261 = scalar_select %p260, %s16, 1
      %s262 = smul.addr %s261, 4
      %s263 = smul.addr %s262, 4
      %s264 = scalar_lea.vmem %s5, %s263
      %v265 = vld [vmem:[%s249] sm:$0xf]
      %v266 = vld [vmem:[%s249 + $0x4] sm:$0xf]
      %v267 = vld [vmem:[%s254] sm:$0xf]
      %v268 = vld [vmem:[%s254 + $0x4] sm:$0xf]
      %v269 = vld [vmem:[%s254 + $0x8] sm:$0xf]
      %v270 = vld [vmem:[%s254 + $0xc] sm:$0xf]
      %v271 = vld [vmem:[%s254 + $0x10] sm:$0xf]
      %v272 = vld [vmem:[%s254 + $0x14] sm:$0xf]
      %v273 = vld [vmem:[%s259] sm:$0x3f]
      %v274 = vld [vmem:[%s259 + $0x8] sm:$0x3f]
      %v275 = vld [vmem:[%s3] sm:$0xff]
      %v276 = vld [vmem:[%s3 + $0x8] sm:$0xff]
      %v277 = vld [vmem:[%s3 + $0x10] sm:$0xff]
      %v278 = vld [vmem:[%s3 + $0x18] sm:$0xff]
      %v279 = vld [vmem:[%s3 + $0x20] sm:$0xff]
      %v280 = vld [vmem:[%s3 + $0x28] sm:$0xff]
      %v281 = vld [vmem:[%s3 + $0x30] sm:$0xff]
      %v282 = vld [vmem:[%s3 + $0x38] sm:$0xff]
      %v283 = vld [vmem:[%s4] sm:$0xff]
      %v284 = vld [vmem:[%s4 + $0x8] sm:$0xff]
      %v285 = vld [vmem:[%s4 + $0x10] sm:$0xff]
      %v286 = vld [vmem:[%s4 + $0x18] sm:$0xff]
      %v287 = vld [vmem:[%s4 + $0x20] sm:$0xff]
      %v288 = vld [vmem:[%s4 + $0x28] sm:$0xff]
      %v289 = vld [vmem:[%s4 + $0x30] sm:$0xff]
      %v290 = vld [vmem:[%s4 + $0x38] sm:$0xff]
      %v293 = vrot.slane %v266, 7
      %vm294 = vcmask 1041409
      %v295 = vsel %vm294, %v293, %v265
      %vm296 = vcmask 523264
      %v297 = vsel %vm296, %v295, 0
      %299 = vmatprep.subr.mxu0 0.0
      %300 = vmatpush1.msra.mxu0 %v275
      %301 = vmatprep.subr.mxu0 0.0
      %302 = vmatpush1.msra.mxu0 %v276
      %303 = vmatprep.subr.mxu0 0.0
      %304 = vmatpush1.msra.mxu0 %v277
      %305 = vmatprep.subr.mxu0 0.0
      %306 = vmatpush1.msra.mxu0 %v278
      %307 = vmatprep.subr.mxu0 0.0
      %308 = vmatpush1.msra.mxu0 %v279
      %309 = vmatprep.subr.mxu0 0.0
      %310 = vmatpush1.msra.mxu0 %v280
      %311 = vmatprep.subr.mxu0 0.0
      %312 = vmatpush1.msra.mxu0 %v281
      %313 = vmatprep.subr.mxu0 0.0
      %314 = vmatpush1.msra.mxu0 %v282
      %315 = vmatprep.subr.mxu0 0.0
      %316 = vmatpush1.msra.mxu0 0.0
      %317 = vmatprep.subr.mxu0 0.0
      %318 = vmatpush1.msra.mxu0 0.0
      %319 = vmatprep.subr.mxu0 0.0
      %320 = vmatpush1.msra.mxu0 0.0
      %321 = vmatprep.subr.mxu0 0.0
      %322 = vmatpush1.msra.mxu0 0.0
      %323 = vmatprep.subr.mxu0 0.0
      %324 = vmatpush1.msra.mxu0 0.0
      %325 = vmatprep.subr.mxu0 0.0
      %326 = vmatpush1.msra.mxu0 0.0
      %327 = vmatprep.subr.mxu0 0.0
      %328 = vmatpush1.msra.mxu0 0.0
      %329 = vmatprep.subr.mxu0 0.0
      %330 = vmatpush1.msra.mxu0 0.0
      %331 = vmatprep.subr.mxu0 0.0
      %332 = vmatpush1.msra.mxu0 0.0
      %333 = vmatprep.subr.mxu0 0.0
      %334 = vmatpush1.msra.mxu0 0.0
      %335 = vmatprep.subr.mxu0 0.0
      %336 = vmatpush1.msra.mxu0 0.0
      %337 = vmatprep.subr.mxu0 0.0
      %338 = vmatpush1.msra.mxu0 0.0
      %339 = vmatprep.subr.mxu0 0.0
      %340 = vmatpush1.msra.mxu0 0.0
      %341 = vmatprep.subr.mxu0 0.0
      %342 = vmatpush1.msra.mxu0 0.0
      %343 = vmatprep.subr.mxu0 0.0
      %344 = vmatpush1.msra.mxu0 0.0
      %345 = vmatprep.subr.mxu0 0.0
      %346 = vmatpush1.msra.mxu0 0.0
      %347 = vmatprep.subr.mxu0 0.0
      %348 = vmatpush1.msra.mxu0 0.0
      %349 = vmatprep.subr.mxu0 0.0
      %350 = vmatpush1.msra.mxu0 0.0
      %351 = vmatprep.subr.mxu0 0.0
      %352 = vmatpush1.msra.mxu0 0.0
      %353 = vmatprep.subr.mxu0 0.0
      %354 = vmatpush1.msra.mxu0 0.0
      %355 = vmatprep.subr.mxu0 0.0
      %356 = vmatpush1.msra.mxu0 0.0
      %357 = vmatprep.subr.mxu0 0.0
      %358 = vmatpush1.msra.mxu0 0.0
      %359 = vmatprep.subr.mxu0 0.0
      %360 = vmatpush1.msra.mxu0 0.0
      %361 = vmatprep.subr.mxu0 0.0
      %362 = vmatpush1.msra.mxu0 0.0
      %363 = vmatprep.mubr.f32.mxu0 0.0
      %364 = vmatmul.mubr.f32.gmra.mrb[0].mxu0 %v297
      %v365 = vpop.f32.mrb[0].mxu0
      %v366 = vadd.f32 0.0, %v365
      %v367 = vpop.f32.mrb[0].mxu0
      %368 = vdwg.mxu0
      %369 = vmatprep.subr.mxu0 0.0
      %370 = vmatpush1.msra.mxu0 %v283
      %371 = vmatprep.subr.mxu0 0.0
      %372 = vmatpush1.msra.mxu0 %v284
      %373 = vmatprep.subr.mxu0 0.0
      %374 = vmatpush1.msra.mxu0 %v285
      %375 = vmatprep.subr.mxu0 0.0
      %376 = vmatpush1.msra.mxu0 %v286
      %377 = vmatprep.subr.mxu0 0.0
      %378 = vmatpush1.msra.mxu0 %v287
      %379 = vmatprep.subr.mxu0 0.0
      %380 = vmatpush1.msra.mxu0 %v288
      %381 = vmatprep.subr.mxu0 0.0
      %382 = vmatpush1.msra.mxu0 %v289
      %383 = vmatprep.subr.mxu0 0.0
      %384 = vmatpush1.msra.mxu0 %v290
      %385 = vmatprep.subr.mxu0 0.0
      %386 = vmatpush1.msra.mxu0 0.0
      %387 = vmatprep.subr.mxu0 0.0
      %388 = vmatpush1.msra.mxu0 0.0
      %389 = vmatprep.subr.mxu0 0.0
      %390 = vmatpush1.msra.mxu0 0.0
      %391 = vmatprep.subr.mxu0 0.0
      %392 = vmatpush1.msra.mxu0 0.0
      %393 = vmatprep.subr.mxu0 0.0
      %394 = vmatpush1.msra.mxu0 0.0
      %395 = vmatprep.subr.mxu0 0.0
      %396 = vmatpush1.msra.mxu0 0.0
      %397 = vmatprep.subr.mxu0 0.0
      %398 = vmatpush1.msra.mxu0 0.0
      %399 = vmatprep.subr.mxu0 0.0
      %400 = vmatpush1.msra.mxu0 0.0
      %401 = vmatprep.subr.mxu0 0.0
      %402 = vmatpush1.msra.mxu0 0.0
      %403 = vmatprep.subr.mxu0 0.0
      %404 = vmatpush1.msra.mxu0 0.0
      %405 = vmatprep.subr.mxu0 0.0
      %406 = vmatpush1.msra.mxu0 0.0
      %407 = vmatprep.subr.mxu0 0.0
      %408 = vmatpush1.msra.mxu0 0.0
      %409 = vmatprep.subr.mxu0 0.0
      %410 = vmatpush1.msra.mxu0 0.0
      %411 = vmatprep.subr.mxu0 0.0
      %412 = vmatpush1.msra.mxu0 0.0
      %413 = vmatprep.subr.mxu0 0.0
      %414 = vmatpush1.msra.mxu0 0.0
      %415 = vmatprep.subr.mxu0 0.0
      %416 = vmatpush1.msra.mxu0 0.0
      %417 = vmatprep.subr.mxu0 0.0
      %418 = vmatpush1.msra.mxu0 0.0
      %419 = vmatprep.subr.mxu0 0.0
      %420 = vmatpush1.msra.mxu0 0.0
      %421 = vmatprep.subr.mxu0 0.0
      %422 = vmatpush1.msra.mxu0 0.0
      %423 = vmatprep.subr.mxu0 0.0
      %424 = vmatpush1.msra.mxu0 0.0
      %425 = vmatprep.subr.mxu0 0.0
      %426 = vmatpush1.msra.mxu0 0.0
      %427 = vmatprep.subr.mxu0 0.0
      %428 = vmatpush1.msra.mxu0 0.0
      %429 = vmatprep.subr.mxu0 0.0
      %430 = vmatpush1.msra.mxu0 0.0
      %431 = vmatprep.subr.mxu0 0.0
      %432 = vmatpush1.msra.mxu0 0.0
      %433 = vmatprep.mubr.f32.mxu0 0.0
      %434 = vmatmul.mubr.f32.gmra.mrb[0].mxu0 %v297
      %v435 = vpop.f32.mrb[0].mxu0
      %v436 = vadd.f32 0.0, %v435
      %v437 = vpop.f32.mrb[0].mxu0
      %438 = vdwg.mxu0
      %v445 = vrot.slane %v268, 7
      %v446 = vsel %vm294, %v445, %v267
      %v447 = vrot.slane %v269, 6
      %vm448 = vcmask 1042434
      %v449 = vsel %vm448, %v447, %v446
      %v450 = vrot.slane %v270, 5
      %vm451 = vcmask 1043459
      %v452 = vsel %vm451, %v450, %v449
      %v453 = vrot.slane %v271, 4
      %vm454 = vcmask 1044484
      %v455 = vsel %vm454, %v453, %v452
      %v456 = vrot.slane %v272, 3
      %vm457 = vcmask 1045509
      %v458 = vsel %vm457, %v456, %v455
      %v459 = vsel %vm296, %v458, 0
      %461 = vmatprep.subr.mxu0 0.0
      %462 = vmatpush1.msra.mxu0 %v275
      %463 = vmatprep.subr.mxu0 0.0
      %464 = vmatpush1.msra.mxu0 %v276
      %465 = vmatprep.subr.mxu0 0.0
      %466 = vmatpush1.msra.mxu0 %v277
      %467 = vmatprep.subr.mxu0 0.0
      %468 = vmatpush1.msra.mxu0 %v278
      %469 = vmatprep.subr.mxu0 0.0
      %470 = vmatpush1.msra.mxu0 %v279
      %471 = vmatprep.subr.mxu0 0.0
      %472 = vmatpush1.msra.mxu0 %v280
      %473 = vmatprep.subr.mxu0 0.0
      %474 = vmatpush1.msra.mxu0 %v281
      %475 = vmatprep.subr.mxu0 0.0
      %476 = vmatpush1.msra.mxu0 %v282
      %477 = vmatprep.subr.mxu0 0.0
      %478 = vmatpush1.msra.mxu0 0.0
      %479 = vmatprep.subr.mxu0 0.0
      %480 = vmatpush1.msra.mxu0 0.0
      %481 = vmatprep.subr.mxu0 0.0
      %482 = vmatpush1.msra.mxu0 0.0
      %483 = vmatprep.subr.mxu0 0.0
      %484 = vmatpush1.msra.mxu0 0.0
      %485 = vmatprep.subr.mxu0 0.0
      %486 = vmatpush1.msra.mxu0 0.0
      %487 = vmatprep.subr.mxu0 0.0
      %488 = vmatpush1.msra.mxu0 0.0
      %489 = vmatprep.subr.mxu0 0.0
      %490 = vmatpush1.msra.mxu0 0.0
      %491 = vmatprep.subr.mxu0 0.0
      %492 = vmatpush1.msra.mxu0 0.0
      %493 = vmatprep.subr.mxu0 0.0
      %494 = vmatpush1.msra.mxu0 0.0
      %495 = vmatprep.subr.mxu0 0.0
      %496 = vmatpush1.msra.mxu0 0.0
      %497 = vmatprep.subr.mxu0 0.0
      %498 = vmatpush1.msra.mxu0 0.0
      %499 = vmatprep.subr.mxu0 0.0
      %500 = vmatpush1.msra.mxu0 0.0
      %501 = vmatprep.subr.mxu0 0.0
      %502 = vmatpush1.msra.mxu0 0.0
      %503 = vmatprep.subr.mxu0 0.0
      %504 = vmatpush1.msra.mxu0 0.0
      %505 = vmatprep.subr.mxu0 0.0
      %506 = vmatpush1.msra.mxu0 0.0
      %507 = vmatprep.subr.mxu0 0.0
      %508 = vmatpush1.msra.mxu0 0.0
      %509 = vmatprep.subr.mxu0 0.0
      %510 = vmatpush1.msra.mxu0 0.0
      %511 = vmatprep.subr.mxu0 0.0
      %512 = vmatpush1.msra.mxu0 0.0
      %513 = vmatprep.subr.mxu0 0.0
      %514 = vmatpush1.msra.mxu0 0.0
      %515 = vmatprep.subr.mxu0 0.0
      %516 = vmatpush1.msra.mxu0 0.0
      %517 = vmatprep.subr.mxu0 0.0
      %518 = vmatpush1.msra.mxu0 0.0
      %519 = vmatprep.subr.mxu0 0.0
      %520 = vmatpush1.msra.mxu0 0.0
      %521 = vmatprep.subr.mxu0 0.0
      %522 = vmatpush1.msra.mxu0 0.0
      %523 = vmatprep.subr.mxu0 0.0
      %524 = vmatpush1.msra.mxu0 0.0
      %525 = vmatprep.mubr.f32.mxu0 0.0
      %526 = vmatmul.mubr.f32.gmra.mrb[0].mxu0 %v459
      %v527 = vpop.f32.mrb[0].mxu0
      %v528 = vadd.f32 0.0, %v527
      %v529 = vpop.f32.mrb[0].mxu0
      %530 = vdwg.mxu0
      %531 = vmatprep.subr.mxu0 0.0
      %532 = vmatpush1.msra.mxu0 %v283
      %533 = vmatprep.subr.mxu0 0.0
      %534 = vmatpush1.msra.mxu0 %v284
      %535 = vmatprep.subr.mxu0 0.0
      %536 = vmatpush1.msra.mxu0 %v285
      %537 = vmatprep.subr.mxu0 0.0
      %538 = vmatpush1.msra.mxu0 %v286
      %539 = vmatprep.subr.mxu0 0.0
      %540 = vmatpush1.msra.mxu0 %v287
      %541 = vmatprep.subr.mxu0 0.0
      %542 = vmatpush1.msra.mxu0 %v288
      %543 = vmatprep.subr.mxu0 0.0
      %544 = vmatpush1.msra.mxu0 %v289
      %545 = vmatprep.subr.mxu0 0.0
      %546 = vmatpush1.msra.mxu0 %v290
      %547 = vmatprep.subr.mxu0 0.0
      %548 = vmatpush1.msra.mxu0 0.0
      %549 = vmatprep.subr.mxu0 0.0
      %550 = vmatpush1.msra.mxu0 0.0
      %551 = vmatprep.subr.mxu0 0.0
      %552 = vmatpush1.msra.mxu0 0.0
      %553 = vmatprep.subr.mxu0 0.0
      %554 = vmatpush1.msra.mxu0 0.0
      %555 = vmatprep.subr.mxu0 0.0
      %556 = vmatpush1.msra.mxu0 0.0
      %557 = vmatprep.subr.mxu0 0.0
      %558 = vmatpush1.msra.mxu0 0.0
      %559 = vmatprep.subr.mxu0 0.0
      %560 = vmatpush1.msra.mxu0 0.0
      %561 = vmatprep.subr.mxu0 0.0
      %562 = vmatpush1.msra.mxu0 0.0
      %563 = vmatprep.subr.mxu0 0.0
      %564 = vmatpush1.msra.mxu0 0.0
      %565 = vmatprep.subr.mxu0 0.0
      %566 = vmatpush1.msra.mxu0 0.0
      %567 = vmatprep.subr.mxu0 0.0
      %568 = vmatpush1.msra.mxu0 0.0
      %569 = vmatprep.subr.mxu0 0.0
      %570 = vmatpush1.msra.mxu0 0.0
      %571 = vmatprep.subr.mxu0 0.0
      %572 = vmatpush1.msra.mxu0 0.0
      %573 = vmatprep.subr.mxu0 0.0
      %574 = vmatpush1.msra.mxu0 0.0
      %575 = vmatprep.subr.mxu0 0.0
      %576 = vmatpush1.msra.mxu0 0.0
      %577 = vmatprep.subr.mxu0 0.0
      %578 = vmatpush1.msra.mxu0 0.0
      %579 = vmatprep.subr.mxu0 0.0
      %580 = vmatpush1.msra.mxu0 0.0
      %581 = vmatprep.subr.mxu0 0.0
      %582 = vmatpush1.msra.mxu0 0.0
      %583 = vmatprep.subr.mxu0 0.0
      %584 = vmatpush1.msra.mxu0 0.0
      %585 = vmatprep.subr.mxu0 0.0
      %586 = vmatpush1.msra.mxu0 0.0
      %587 = vmatprep.subr.mxu0 0.0
      %588 = vmatpush1.msra.mxu0 0.0
      %589 = vmatprep.subr.mxu0 0.0
      %590 = vmatpush1.msra.mxu0 0.0
      %591 = vmatprep.subr.mxu0 0.0
      %592 = vmatpush1.msra.mxu0 0.0
      %593 = vmatprep.subr.mxu0 0.0
      %594 = vmatpush1.msra.mxu0 0.0
      %595 = vmatprep.mubr.f32.mxu0 0.0
      %596 = vmatmul.mubr.f32.gmra.mrb[0].mxu0 %v459
      %v597 = vpop.f32.mrb[0].mxu0
      %v598 = vadd.f32 0.0, %v597
      %v599 = vpop.f32.mrb[0].mxu0
      %600 = vdwg.mxu0
      %v601 = vmul.f32 %v366, %v366
      %v602 = vadd.f32 %v601, 0.0
      %v603 = vmul.f32 %v436, %v436
      %v604 = vadd.f32 %v602, %v603
      %v605 = vmul.f32 %v528, %v528
      %v606 = vadd.f32 %v605, 0.0
      %v607 = vmul.f32 %v598, %v598
      %v608 = vadd.f32 %v606, %v607
      %v611 = vunpack.c.l.s4 1966171168
      %v612 = vunpack.c.0.s8 %v611
      %v613 = vlaneseq
      %v614 = vshrl.u32 %v613, 7
      %v615 = vsub.s32 %v612, %v614
      %v616 = vrot.slane %v366, %v615
      %v617 = vcombine.high %v616, %v616
      %v619 = vunpack.c.l.s4 1966171168
      %v620 = vunpack.c.0.s8 %v619
      %v621 = vlaneseq
      %v622 = vshrl.u32 %v621, 7
      %v623 = vsub.s32 %v620, %v622
      %v624 = vrot.slane %v616, %v623
      %v626 = vunpack.c.l.s4 1966171168
      %v627 = vunpack.c.0.s8 %v626
      %v628 = vlaneseq
      %v629 = vshrl.u32 %v628, 7
      %v630 = vsub.s32 %v627, %v629
      %v631 = vrot.slane %v617, %v630
      %v632 = vlaneseq
      %v633 = vshrl.u32 %v632, 7
      %v634 = vsub.s32 0, %v633
      %v635 = vrot.slane %v624, %v634
      %v636 = vlaneseq
      %v637 = vshrl.u32 %v636, 7
      %v638 = vsub.s32 0, %v637
      %v639 = vrot.slane %v631, %v638
      %v642 = vmul.f32 %v635, %v528
      %v643 = vmul.f32 %v639, %v528
      %v644 = vadd.f32 %v642, 0.0
      %v645 = vadd.f32 %v643, 0.0
      %v648 = vunpack.c.l.s4 1966171168
      %v649 = vunpack.c.0.s8 %v648
      %v650 = vlaneseq
      %v651 = vshrl.u32 %v650, 7
      %v652 = vsub.s32 %v649, %v651
      %v653 = vrot.slane %v436, %v652
      %v654 = vcombine.high %v653, %v653
      %v656 = vunpack.c.l.s4 1966171168
      %v657 = vunpack.c.0.s8 %v656
      %v658 = vlaneseq
      %v659 = vshrl.u32 %v658, 7
      %v660 = vsub.s32 %v657, %v659
      %v661 = vrot.slane %v653, %v660
      %v663 = vunpack.c.l.s4 1966171168
      %v664 = vunpack.c.0.s8 %v663
      %v665 = vlaneseq
      %v666 = vshrl.u32 %v665, 7
      %v667 = vsub.s32 %v664, %v666
      %v668 = vrot.slane %v654, %v667
      %v669 = vlaneseq
      %v670 = vshrl.u32 %v669, 7
      %v671 = vsub.s32 0, %v670
      %v672 = vrot.slane %v661, %v671
      %v673 = vlaneseq
      %v674 = vshrl.u32 %v673, 7
      %v675 = vsub.s32 0, %v674
      %v676 = vrot.slane %v668, %v675
      %v679 = vmul.f32 %v672, %v598
      %v680 = vmul.f32 %v676, %v598
      %v681 = vadd.f32 %v644, %v679
      %v682 = vadd.f32 %v645, %v680
      %v683 = vmul.f32 %v672, %v528
      %v684 = vmul.f32 %v676, %v528
      %v685 = vadd.f32 %v683, 0.0
      %v686 = vadd.f32 %v684, 0.0
      %v687 = vmul.f32 %v635, %v598
      %v688 = vmul.f32 %v639, %v598
      %v689 = vsub.f32 %v685, %v687
      %v690 = vsub.f32 %v686, %v688
      %v691 = vrot.slane %v265, 1
      %v692 = vsel %vm294, %v266, %v691
      %v693 = vsel %vm296, %v692, 0
      %695 = vmatprep.subr.mxu0 0.0
      %696 = vmatpush1.msra.mxu0 %v275
      %697 = vmatprep.subr.mxu0 0.0
      %698 = vmatpush1.msra.mxu0 %v276
      %699 = vmatprep.subr.mxu0 0.0
      %700 = vmatpush1.msra.mxu0 %v277
      %701 = vmatprep.subr.mxu0 0.0
      %702 = vmatpush1.msra.mxu0 %v278
      %703 = vmatprep.subr.mxu0 0.0
      %704 = vmatpush1.msra.mxu0 %v279
      %705 = vmatprep.subr.mxu0 0.0
      %706 = vmatpush1.msra.mxu0 %v280
      %707 = vmatprep.subr.mxu0 0.0
      %708 = vmatpush1.msra.mxu0 %v281
      %709 = vmatprep.subr.mxu0 0.0
      %710 = vmatpush1.msra.mxu0 %v282
      %711 = vmatprep.subr.mxu0 0.0
      %712 = vmatpush1.msra.mxu0 0.0
      %713 = vmatprep.subr.mxu0 0.0
      %714 = vmatpush1.msra.mxu0 0.0
      %715 = vmatprep.subr.mxu0 0.0
      %716 = vmatpush1.msra.mxu0 0.0
      %717 = vmatprep.subr.mxu0 0.0
      %718 = vmatpush1.msra.mxu0 0.0
      %719 = vmatprep.subr.mxu0 0.0
      %720 = vmatpush1.msra.mxu0 0.0
      %721 = vmatprep.subr.mxu0 0.0
      %722 = vmatpush1.msra.mxu0 0.0
      %723 = vmatprep.subr.mxu0 0.0
      %724 = vmatpush1.msra.mxu0 0.0
      %725 = vmatprep.subr.mxu0 0.0
      %726 = vmatpush1.msra.mxu0 0.0
      %727 = vmatprep.subr.mxu0 0.0
      %728 = vmatpush1.msra.mxu0 0.0
      %729 = vmatprep.subr.mxu0 0.0
      %730 = vmatpush1.msra.mxu0 0.0
      %731 = vmatprep.subr.mxu0 0.0
      %732 = vmatpush1.msra.mxu0 0.0
      %733 = vmatprep.subr.mxu0 0.0
      %734 = vmatpush1.msra.mxu0 0.0
      %735 = vmatprep.subr.mxu0 0.0
      %736 = vmatpush1.msra.mxu0 0.0
      %737 = vmatprep.subr.mxu0 0.0
      %738 = vmatpush1.msra.mxu0 0.0
      %739 = vmatprep.subr.mxu0 0.0
      %740 = vmatpush1.msra.mxu0 0.0
      %741 = vmatprep.subr.mxu0 0.0
      %742 = vmatpush1.msra.mxu0 0.0
      %743 = vmatprep.subr.mxu0 0.0
      %744 = vmatpush1.msra.mxu0 0.0
      %745 = vmatprep.subr.mxu0 0.0
      %746 = vmatpush1.msra.mxu0 0.0
      %747 = vmatprep.subr.mxu0 0.0
      %748 = vmatpush1.msra.mxu0 0.0
      %749 = vmatprep.subr.mxu0 0.0
      %750 = vmatpush1.msra.mxu0 0.0
      %751 = vmatprep.subr.mxu0 0.0
      %752 = vmatpush1.msra.mxu0 0.0
      %753 = vmatprep.subr.mxu0 0.0
      %754 = vmatpush1.msra.mxu0 0.0
      %755 = vmatprep.subr.mxu0 0.0
      %756 = vmatpush1.msra.mxu0 0.0
      %757 = vmatprep.subr.mxu0 0.0
      %758 = vmatpush1.msra.mxu0 0.0
      %759 = vmatprep.mubr.f32.mxu0 0.0
      %760 = vmatmul.mubr.f32.gmra.mrb[0].mxu0 %v693
      %v761 = vpop.f32.mrb[0].mxu0
      %v762 = vadd.f32 0.0, %v761
      %v763 = vpop.f32.mrb[0].mxu0
      %764 = vdwg.mxu0
      %765 = vmatprep.subr.mxu0 0.0
      %766 = vmatpush1.msra.mxu0 %v283
      %767 = vmatprep.subr.mxu0 0.0
      %768 = vmatpush1.msra.mxu0 %v284
      %769 = vmatprep.subr.mxu0 0.0
      %770 = vmatpush1.msra.mxu0 %v285
      %771 = vmatprep.subr.mxu0 0.0
      %772 = vmatpush1.msra.mxu0 %v286
      %773 = vmatprep.subr.mxu0 0.0
      %774 = vmatpush1.msra.mxu0 %v287
      %775 = vmatprep.subr.mxu0 0.0
      %776 = vmatpush1.msra.mxu0 %v288
      %777 = vmatprep.subr.mxu0 0.0
      %778 = vmatpush1.msra.mxu0 %v289
      %779 = vmatprep.subr.mxu0 0.0
      %780 = vmatpush1.msra.mxu0 %v290
      %781 = vmatprep.subr.mxu0 0.0
      %782 = vmatpush1.msra.mxu0 0.0
      %783 = vmatprep.subr.mxu0 0.0
      %784 = vmatpush1.msra.mxu0 0.0
      %785 = vmatprep.subr.mxu0 0.0
      %786 = vmatpush1.msra.mxu0 0.0
      %787 = vmatprep.subr.mxu0 0.0
      %788 = vmatpush1.msra.mxu0 0.0
      %789 = vmatprep.subr.mxu0 0.0
      %790 = vmatpush1.msra.mxu0 0.0
      %791 = vmatprep.subr.mxu0 0.0
      %792 = vmatpush1.msra.mxu0 0.0
      %793 = vmatprep.subr.mxu0 0.0
      %794 = vmatpush1.msra.mxu0 0.0
      %795 = vmatprep.subr.mxu0 0.0
      %796 = vmatpush1.msra.mxu0 0.0
      %797 = vmatprep.subr.mxu0 0.0
      %798 = vmatpush1.msra.mxu0 0.0
      %799 = vmatprep.subr.mxu0 0.0
      %800 = vmatpush1.msra.mxu0 0.0
      %801 = vmatprep.subr.mxu0 0.0
      %802 = vmatpush1.msra.mxu0 0.0
      %803 = vmatprep.subr.mxu0 0.0
      %804 = vmatpush1.msra.mxu0 0.0
      %805 = vmatprep.subr.mxu0 0.0
      %806 = vmatpush1.msra.mxu0 0.0
      %807 = vmatprep.subr.mxu0 0.0
      %808 = vmatpush1.msra.mxu0 0.0
      %809 = vmatprep.subr.mxu0 0.0
      %810 = vmatpush1.msra.mxu0 0.0
      %811 = vmatprep.subr.mxu0 0.0
      %812 = vmatpush1.msra.mxu0 0.0
      %813 = vmatprep.subr.mxu0 0.0
      %814 = vmatpush1.msra.mxu0 0.0
      %815 = vmatprep.subr.mxu0 0.0
      %816 = vmatpush1.msra.mxu0 0.0
      %817 = vmatprep.subr.mxu0 0.0
      %818 = vmatpush1.msra.mxu0 0.0
      %819 = vmatprep.subr.mxu0 0.0
      %820 = vmatpush1.msra.mxu0 0.0
      %821 = vmatprep.subr.mxu0 0.0
      %822 = vmatpush1.msra.mxu0 0.0
      %823 = vmatprep.subr.mxu0 0.0
      %824 = vmatpush1.msra.mxu0 0.0
      %825 = vmatprep.subr.mxu0 0.0
      %826 = vmatpush1.msra.mxu0 0.0
      %827 = vmatprep.subr.mxu0 0.0
      %828 = vmatpush1.msra.mxu0 0.0
      %829 = vmatprep.mubr.f32.mxu0 0.0
      %830 = vmatmul.mubr.f32.gmra.mrb[0].mxu0 %v693
      %v831 = vpop.f32.mrb[0].mxu0
      %v832 = vadd.f32 0.0, %v831
      %v833 = vpop.f32.mrb[0].mxu0
      %834 = vdwg.mxu0
      %v835 = vrot.slane %v267, 1
      %v836 = vsel %vm294, %v268, %v835
      %v837 = vrot.slane %v269, 7
      %v838 = vsel %vm448, %v837, %v836
      %v839 = vrot.slane %v270, 6
      %v840 = vsel %vm451, %v839, %v838
      %v841 = vrot.slane %v271, 5
      %v842 = vsel %vm454, %v841, %v840
      %v843 = vrot.slane %v272, 4
      %v844 = vsel %vm457, %v843, %v842
      %v845 = vsel %vm296, %v844, 0
      %847 = vmatprep.subr.mxu0 0.0
      %848 = vmatpush1.msra.mxu0 %v275
      %849 = vmatprep.subr.mxu0 0.0
      %850 = vmatpush1.msra.mxu0 %v276
      %851 = vmatprep.subr.mxu0 0.0
      %852 = vmatpush1.msra.mxu0 %v277
      %853 = vmatprep.subr.mxu0 0.0
      %854 = vmatpush1.msra.mxu0 %v278
      %855 = vmatprep.subr.mxu0 0.0
      %856 = vmatpush1.msra.mxu0 %v279
      %857 = vmatprep.subr.mxu0 0.0
      %858 = vmatpush1.msra.mxu0 %v280
      %859 = vmatprep.subr.mxu0 0.0
      %860 = vmatpush1.msra.mxu0 %v281
      %861 = vmatprep.subr.mxu0 0.0
      %862 = vmatpush1.msra.mxu0 %v282
      %863 = vmatprep.subr.mxu0 0.0
      %864 = vmatpush1.msra.mxu0 0.0
      %865 = vmatprep.subr.mxu0 0.0
      %866 = vmatpush1.msra.mxu0 0.0
      %867 = vmatprep.subr.mxu0 0.0
      %868 = vmatpush1.msra.mxu0 0.0
      %869 = vmatprep.subr.mxu0 0.0
      %870 = vmatpush1.msra.mxu0 0.0
      %871 = vmatprep.subr.mxu0 0.0
      %872 = vmatpush1.msra.mxu0 0.0
      %873 = vmatprep.subr.mxu0 0.0
      %874 = vmatpush1.msra.mxu0 0.0
      %875 = vmatprep.subr.mxu0 0.0
      %876 = vmatpush1.msra.mxu0 0.0
      %877 = vmatprep.subr.mxu0 0.0
      %878 = vmatpush1.msra.mxu0 0.0
      %879 = vmatprep.subr.mxu0 0.0
      %880 = vmatpush1.msra.mxu0 0.0
      %881 = vmatprep.subr.mxu0 0.0
      %882 = vmatpush1.msra.mxu0 0.0
      %883 = vmatprep.subr.mxu0 0.0
      %884 = vmatpush1.msra.mxu0 0.0
      %885 = vmatprep.subr.mxu0 0.0
      %886 = vmatpush1.msra.mxu0 0.0
      %887 = vmatprep.subr.mxu0 0.0
      %888 = vmatpush1.msra.mxu0 0.0
      %889 = vmatprep.subr.mxu0 0.0
      %890 = vmatpush1.msra.mxu0 0.0
      %891 = vmatprep.subr.mxu0 0.0
      %892 = vmatpush1.msra.mxu0 0.0
      %893 = vmatprep.subr.mxu0 0.0
      %894 = vmatpush1.msra.mxu0 0.0
      %895 = vmatprep.subr.mxu0 0.0
      %896 = vmatpush1.msra.mxu0 0.0
      %897 = vmatprep.subr.mxu0 0.0
      %898 = vmatpush1.msra.mxu0 0.0
      %899 = vmatprep.subr.mxu0 0.0
      %900 = vmatpush1.msra.mxu0 0.0
      %901 = vmatprep.subr.mxu0 0.0
      %902 = vmatpush1.msra.mxu0 0.0
      %903 = vmatprep.subr.mxu0 0.0
      %904 = vmatpush1.msra.mxu0 0.0
      %905 = vmatprep.subr.mxu0 0.0
      %906 = vmatpush1.msra.mxu0 0.0
      %907 = vmatprep.subr.mxu0 0.0
      %908 = vmatpush1.msra.mxu0 0.0
      %909 = vmatprep.subr.mxu0 0.0
      %910 = vmatpush1.msra.mxu0 0.0
      %911 = vmatprep.mubr.f32.mxu0 0.0
      %912 = vmatmul.mubr.f32.gmra.mrb[0].mxu0 %v845
      %v913 = vpop.f32.mrb[0].mxu0
      %v914 = vadd.f32 0.0, %v913
      %v915 = vpop.f32.mrb[0].mxu0
      %916 = vdwg.mxu0
      %917 = vmatprep.subr.mxu0 0.0
      %918 = vmatpush1.msra.mxu0 %v283
      %919 = vmatprep.subr.mxu0 0.0
      %920 = vmatpush1.msra.mxu0 %v284
      %921 = vmatprep.subr.mxu0 0.0
      %922 = vmatpush1.msra.mxu0 %v285
      %923 = vmatprep.subr.mxu0 0.0
      %924 = vmatpush1.msra.mxu0 %v286
      %925 = vmatprep.subr.mxu0 0.0
      %926 = vmatpush1.msra.mxu0 %v287
      %927 = vmatprep.subr.mxu0 0.0
      %928 = vmatpush1.msra.mxu0 %v288
      %929 = vmatprep.subr.mxu0 0.0
      %930 = vmatpush1.msra.mxu0 %v289
      %931 = vmatprep.subr.mxu0 0.0
      %932 = vmatpush1.msra.mxu0 %v290
      %933 = vmatprep.subr.mxu0 0.0
      %934 = vmatpush1.msra.mxu0 0.0
      %935 = vmatprep.subr.mxu0 0.0
      %936 = vmatpush1.msra.mxu0 0.0
      %937 = vmatprep.subr.mxu0 0.0
      %938 = vmatpush1.msra.mxu0 0.0
      %939 = vmatprep.subr.mxu0 0.0
      %940 = vmatpush1.msra.mxu0 0.0
      %941 = vmatprep.subr.mxu0 0.0
      %942 = vmatpush1.msra.mxu0 0.0
      %943 = vmatprep.subr.mxu0 0.0
      %944 = vmatpush1.msra.mxu0 0.0
      %945 = vmatprep.subr.mxu0 0.0
      %946 = vmatpush1.msra.mxu0 0.0
      %947 = vmatprep.subr.mxu0 0.0
      %948 = vmatpush1.msra.mxu0 0.0
      %949 = vmatprep.subr.mxu0 0.0
      %950 = vmatpush1.msra.mxu0 0.0
      %951 = vmatprep.subr.mxu0 0.0
      %952 = vmatpush1.msra.mxu0 0.0
      %953 = vmatprep.subr.mxu0 0.0
      %954 = vmatpush1.msra.mxu0 0.0
      %955 = vmatprep.subr.mxu0 0.0
      %956 = vmatpush1.msra.mxu0 0.0
      %957 = vmatprep.subr.mxu0 0.0
      %958 = vmatpush1.msra.mxu0 0.0
      %959 = vmatprep.subr.mxu0 0.0
      %960 = vmatpush1.msra.mxu0 0.0
      %961 = vmatprep.subr.mxu0 0.0
      %962 = vmatpush1.msra.mxu0 0.0
      %963 = vmatprep.subr.mxu0 0.0
      %964 = vmatpush1.msra.mxu0 0.0
      %965 = vmatprep.subr.mxu0 0.0
      %966 = vmatpush1.msra.mxu0 0.0
      %967 = vmatprep.subr.mxu0 0.0
      %968 = vmatpush1.msra.mxu0 0.0
      %969 = vmatprep.subr.mxu0 0.0
      %970 = vmatpush1.msra.mxu0 0.0
      %971 = vmatprep.subr.mxu0 0.0
      %972 = vmatpush1.msra.mxu0 0.0
      %973 = vmatprep.subr.mxu0 0.0
      %974 = vmatpush1.msra.mxu0 0.0
      %975 = vmatprep.subr.mxu0 0.0
      %976 = vmatpush1.msra.mxu0 0.0
      %977 = vmatprep.subr.mxu0 0.0
      %978 = vmatpush1.msra.mxu0 0.0
      %979 = vmatprep.subr.mxu0 0.0
      %980 = vmatpush1.msra.mxu0 0.0
      %981 = vmatprep.mubr.f32.mxu0 0.0
      %982 = vmatmul.mubr.f32.gmra.mrb[0].mxu0 %v845
      %v983 = vpop.f32.mrb[0].mxu0
      %v984 = vadd.f32 0.0, %v983
      %v985 = vpop.f32.mrb[0].mxu0
      %986 = vdwg.mxu0
      %v987 = vmul.f32 %v762, %v762
      %v988 = vadd.f32 %v604, %v987
      %v989 = vmul.f32 %v832, %v832
      %v990 = vadd.f32 %v988, %v989
      %v991 = vmul.f32 %v914, %v914
      %v992 = vadd.f32 %v608, %v991
      %v993 = vmul.f32 %v984, %v984
      %v994 = vadd.f32 %v992, %v993
      %v997 = vunpack.c.l.s4 1966171168
      %v998 = vunpack.c.0.s8 %v997
      %v999 = vlaneseq
      %v1000 = vshrl.u32 %v999, 7
      %v1001 = vsub.s32 %v998, %v1000
      %v1002 = vrot.slane %v762, %v1001
      %v1003 = vcombine.high %v1002, %v1002
      %v1005 = vunpack.c.l.s4 1966171168
      %v1006 = vunpack.c.0.s8 %v1005
      %v1007 = vlaneseq
      %v1008 = vshrl.u32 %v1007, 7
      %v1009 = vsub.s32 %v1006, %v1008
      %v1010 = vrot.slane %v1002, %v1009
      %v1012 = vunpack.c.l.s4 1966171168
      %v1013 = vunpack.c.0.s8 %v1012
      %v1014 = vlaneseq
      %v1015 = vshrl.u32 %v1014, 7
      %v1016 = vsub.s32 %v1013, %v1015
      %v1017 = vrot.slane %v1003, %v1016
      %v1018 = vlaneseq
      %v1019 = vshrl.u32 %v1018, 7
      %v1020 = vsub.s32 0, %v1019
      %v1021 = vrot.slane %v1010, %v1020
      %v1022 = vlaneseq
      %v1023 = vshrl.u32 %v1022, 7
      %v1024 = vsub.s32 0, %v1023
      %v1025 = vrot.slane %v1017, %v1024
      %v1028 = vmul.f32 %v1021, %v914
      %v1029 = vmul.f32 %v1025, %v914
      %v1030 = vadd.f32 %v681, %v1028
      %v1031 = vadd.f32 %v682, %v1029
      %v1034 = vunpack.c.l.s4 1966171168
      %v1035 = vunpack.c.0.s8 %v1034
      %v1036 = vlaneseq
      %v1037 = vshrl.u32 %v1036, 7
      %v1038 = vsub.s32 %v1035, %v1037
      %v1039 = vrot.slane %v832, %v1038
      %v1040 = vcombine.high %v1039, %v1039
      %v1042 = vunpack.c.l.s4 1966171168
      %v1043 = vunpack.c.0.s8 %v1042
      %v1044 = vlaneseq
      %v1045 = vshrl.u32 %v1044, 7
      %v1046 = vsub.s32 %v1043, %v1045
      %v1047 = vrot.slane %v1039, %v1046
      %v1049 = vunpack.c.l.s4 1966171168
      %v1050 = vunpack.c.0.s8 %v1049
      %v1051 = vlaneseq
      %v1052 = vshrl.u32 %v1051, 7
      %v1053 = vsub.s32 %v1050, %v1052
      %v1054 = vrot.slane %v1040, %v1053
      %v1055 = vlaneseq
      %v1056 = vshrl.u32 %v1055, 7
      %v1057 = vsub.s32 0, %v1056
      %v1058 = vrot.slane %v1047, %v1057
      %v1059 = vlaneseq
      %v1060 = vshrl.u32 %v1059, 7
      %v1061 = vsub.s32 0, %v1060
      %v1062 = vrot.slane %v1054, %v1061
      %v1065 = vmul.f32 %v1058, %v984
      %v1066 = vmul.f32 %v1062, %v984
      %v1067 = vadd.f32 %v1030, %v1065
      %v1068 = vadd.f32 %v1031, %v1066
      %v1069 = vmul.f32 %v1058, %v914
      %v1070 = vmul.f32 %v1062, %v914
      %v1071 = vadd.f32 %v689, %v1069
      %v1072 = vadd.f32 %v690, %v1070
      %v1073 = vmul.f32 %v1021, %v984
      %v1074 = vmul.f32 %v1025, %v984
      %v1075 = vsub.f32 %v1071, %v1073
      %v1076 = vsub.f32 %v1072, %v1074
      %v1077 = vrot.slane %v265, 2
      %v1078 = vrot.slane %v266, 1
      %v1079 = vsel %vm294, %v1078, %v1077
      %v1080 = vsel %vm296, %v1079, 0
      %1082 = vmatprep.subr.mxu0 0.0
      %1083 = vmatpush1.msra.mxu0 %v275
      %1084 = vmatprep.subr.mxu0 0.0
      %1085 = vmatpush1.msra.mxu0 %v276
      %1086 = vmatprep.subr.mxu0 0.0
      %1087 = vmatpush1.msra.mxu0 %v277
      %1088 = vmatprep.subr.mxu0 0.0
      %1089 = vmatpush1.msra.mxu0 %v278
      %1090 = vmatprep.subr.mxu0 0.0
      %1091 = vmatpush1.msra.mxu0 %v279
      %1092 = vmatprep.subr.mxu0 0.0
      %1093 = vmatpush1.msra.mxu0 %v280
      %1094 = vmatprep.subr.mxu0 0.0
      %1095 = vmatpush1.msra.mxu0 %v281
      %1096 = vmatprep.subr.mxu0 0.0
      %1097 = vmatpush1.msra.mxu0 %v282
      %1098 = vmatprep.subr.mxu0 0.0
      %1099 = vmatpush1.msra.mxu0 0.0
      %1100 = vmatprep.subr.mxu0 0.0
      %1101 = vmatpush1.msra.mxu0 0.0
      %1102 = vmatprep.subr.mxu0 0.0
      %1103 = vmatpush1.msra.mxu0 0.0
      %1104 = vmatprep.subr.mxu0 0.0
      %1105 = vmatpush1.msra.mxu0 0.0
      %1106 = vmatprep.subr.mxu0 0.0
      %1107 = vmatpush1.msra.mxu0 0.0
      %1108 = vmatprep.subr.mxu0 0.0
      %1109 = vmatpush1.msra.mxu0 0.0
      %1110 = vmatprep.subr.mxu0 0.0
      %1111 = vmatpush1.msra.mxu0 0.0
      %1112 = vmatprep.subr.mxu0 0.0
      %1113 = vmatpush1.msra.mxu0 0.0
      %1114 = vmatprep.subr.mxu0 0.0
      %1115 = vmatpush1.msra.mxu0 0.0
      %1116 = vmatprep.subr.mxu0 0.0
      %1117 = vmatpush1.msra.mxu0 0.0
      %1118 = vmatprep.subr.mxu0 0.0
      %1119 = vmatpush1.msra.mxu0 0.0
      %1120 = vmatprep.subr.mxu0 0.0
      %1121 = vmatpush1.msra.mxu0 0.0
      %1122 = vmatprep.subr.mxu0 0.0
      %1123 = vmatpush1.msra.mxu0 0.0
      %1124 = vmatprep.subr.mxu0 0.0
      %1125 = vmatpush1.msra.mxu0 0.0
      %1126 = vmatprep.subr.mxu0 0.0
      %1127 = vmatpush1.msra.mxu0 0.0
      %1128 = vmatprep.subr.mxu0 0.0
      %1129 = vmatpush1.msra.mxu0 0.0
      %1130 = vmatprep.subr.mxu0 0.0
      %1131 = vmatpush1.msra.mxu0 0.0
      %1132 = vmatprep.subr.mxu0 0.0
      %1133 = vmatpush1.msra.mxu0 0.0
      %1134 = vmatprep.subr.mxu0 0.0
      %1135 = vmatpush1.msra.mxu0 0.0
      %1136 = vmatprep.subr.mxu0 0.0
      %1137 = vmatpush1.msra.mxu0 0.0
      %1138 = vmatprep.subr.mxu0 0.0
      %1139 = vmatpush1.msra.mxu0 0.0
      %1140 = vmatprep.subr.mxu0 0.0
      %1141 = vmatpush1.msra.mxu0 0.0
      %1142 = vmatprep.subr.mxu0 0.0
      %1143 = vmatpush1.msra.mxu0 0.0
      %1144 = vmatprep.subr.mxu0 0.0
      %1145 = vmatpush1.msra.mxu0 0.0
      %1146 = vmatprep.mubr.f32.mxu0 0.0
      %1147 = vmatmul.mubr.f32.gmra.mrb[0].mxu0 %v1080
      %v1148 = vpop.f32.mrb[0].mxu0
      %v1149 = vadd.f32 0.0, %v1148
      %v1150 = vpop.f32.mrb[0].mxu0
      %1151 = vdwg.mxu0
      %1152 = vmatprep.subr.mxu0 0.0
      %1153 = vmatpush1.msra.mxu0 %v283
      %1154 = vmatprep.subr.mxu0 0.0
      %1155 = vmatpush1.msra.mxu0 %v284
      %1156 = vmatprep.subr.mxu0 0.0
      %1157 = vmatpush1.msra.mxu0 %v285
      %1158 = vmatprep.subr.mxu0 0.0
      %1159 = vmatpush1.msra.mxu0 %v286
      %1160 = vmatprep.subr.mxu0 0.0
      %1161 = vmatpush1.msra.mxu0 %v287
      %1162 = vmatprep.subr.mxu0 0.0
      %1163 = vmatpush1.msra.mxu0 %v288
      %1164 = vmatprep.subr.mxu0 0.0
      %1165 = vmatpush1.msra.mxu0 %v289
      %1166 = vmatprep.subr.mxu0 0.0
      %1167 = vmatpush1.msra.mxu0 %v290
      %1168 = vmatprep.subr.mxu0 0.0
      %1169 = vmatpush1.msra.mxu0 0.0
      %1170 = vmatprep.subr.mxu0 0.0
      %1171 = vmatpush1.msra.mxu0 0.0
      %1172 = vmatprep.subr.mxu0 0.0
      %1173 = vmatpush1.msra.mxu0 0.0
      %1174 = vmatprep.subr.mxu0 0.0
      %1175 = vmatpush1.msra.mxu0 0.0
      %1176 = vmatprep.subr.mxu0 0.0
      %1177 = vmatpush1.msra.mxu0 0.0
      %1178 = vmatprep.subr.mxu0 0.0
      %1179 = vmatpush1.msra.mxu0 0.0
      %1180 = vmatprep.subr.mxu0 0.0
      %1181 = vmatpush1.msra.mxu0 0.0
      %1182 = vmatprep.subr.mxu0 0.0
      %1183 = vmatpush1.msra.mxu0 0.0
      %1184 = vmatprep.subr.mxu0 0.0
      %1185 = vmatpush1.msra.mxu0 0.0
      %1186 = vmatprep.subr.mxu0 0.0
      %1187 = vmatpush1.msra.mxu0 0.0
      %1188 = vmatprep.subr.mxu0 0.0
      %1189 = vmatpush1.msra.mxu0 0.0
      %1190 = vmatprep.subr.mxu0 0.0
      %1191 = vmatpush1.msra.mxu0 0.0
      %1192 = vmatprep.subr.mxu0 0.0
      %1193 = vmatpush1.msra.mxu0 0.0
      %1194 = vmatprep.subr.mxu0 0.0
      %1195 = vmatpush1.msra.mxu0 0.0
      %1196 = vmatprep.subr.mxu0 0.0
      %1197 = vmatpush1.msra.mxu0 0.0
      %1198 = vmatprep.subr.mxu0 0.0
      %1199 = vmatpush1.msra.mxu0 0.0
      %1200 = vmatprep.subr.mxu0 0.0
      %1201 = vmatpush1.msra.mxu0 0.0
      %1202 = vmatprep.subr.mxu0 0.0
      %1203 = vmatpush1.msra.mxu0 0.0
      %1204 = vmatprep.subr.mxu0 0.0
      %1205 = vmatpush1.msra.mxu0 0.0
      %1206 = vmatprep.subr.mxu0 0.0
      %1207 = vmatpush1.msra.mxu0 0.0
      %1208 = vmatprep.subr.mxu0 0.0
      %1209 = vmatpush1.msra.mxu0 0.0
      %1210 = vmatprep.subr.mxu0 0.0
      %1211 = vmatpush1.msra.mxu0 0.0
      %1212 = vmatprep.subr.mxu0 0.0
      %1213 = vmatpush1.msra.mxu0 0.0
      %1214 = vmatprep.subr.mxu0 0.0
      %1215 = vmatpush1.msra.mxu0 0.0
      %1216 = vmatprep.mubr.f32.mxu0 0.0
      %1217 = vmatmul.mubr.f32.gmra.mrb[0].mxu0 %v1080
      %v1218 = vpop.f32.mrb[0].mxu0
      %v1219 = vadd.f32 0.0, %v1218
      %v1220 = vpop.f32.mrb[0].mxu0
      %1221 = vdwg.mxu0
      %v1222 = vrot.slane %v267, 2
      %v1223 = vrot.slane %v268, 1
      %v1224 = vsel %vm294, %v1223, %v1222
      %v1225 = vsel %vm448, %v269, %v1224
      %v1226 = vrot.slane %v270, 7
      %v1227 = vsel %vm451, %v1226, %v1225
      %v1228 = vrot.slane %v271, 6
      %v1229 = vsel %vm454, %v1228, %v1227
      %v1230 = vrot.slane %v272, 5
      %v1231 = vsel %vm457, %v1230, %v1229
      %v1232 = vsel %vm296, %v1231, 0
      %1234 = vmatprep.subr.mxu0 0.0
      %1235 = vmatpush1.msra.mxu0 %v275
      %1236 = vmatprep.subr.mxu0 0.0
      %1237 = vmatpush1.msra.mxu0 %v276
      %1238 = vmatprep.subr.mxu0 0.0
      %1239 = vmatpush1.msra.mxu0 %v277
      %1240 = vmatprep.subr.mxu0 0.0
      %1241 = vmatpush1.msra.mxu0 %v278
      %1242 = vmatprep.subr.mxu0 0.0
      %1243 = vmatpush1.msra.mxu0 %v279
      %1244 = vmatprep.subr.mxu0 0.0
      %1245 = vmatpush1.msra.mxu0 %v280
      %1246 = vmatprep.subr.mxu0 0.0
      %1247 = vmatpush1.msra.mxu0 %v281
      %1248 = vmatprep.subr.mxu0 0.0
      %1249 = vmatpush1.msra.mxu0 %v282
      %1250 = vmatprep.subr.mxu0 0.0
      %1251 = vmatpush1.msra.mxu0 0.0
      %1252 = vmatprep.subr.mxu0 0.0
      %1253 = vmatpush1.msra.mxu0 0.0
      %1254 = vmatprep.subr.mxu0 0.0
      %1255 = vmatpush1.msra.mxu0 0.0
      %1256 = vmatprep.subr.mxu0 0.0
      %1257 = vmatpush1.msra.mxu0 0.0
      %1258 = vmatprep.subr.mxu0 0.0
      %1259 = vmatpush1.msra.mxu0 0.0
      %1260 = vmatprep.subr.mxu0 0.0
      %1261 = vmatpush1.msra.mxu0 0.0
      %1262 = vmatprep.subr.mxu0 0.0
      %1263 = vmatpush1.msra.mxu0 0.0
      %1264 = vmatprep.subr.mxu0 0.0
      %1265 = vmatpush1.msra.mxu0 0.0
      %1266 = vmatprep.subr.mxu0 0.0
      %1267 = vmatpush1.msra.mxu0 0.0
      %1268 = vmatprep.subr.mxu0 0.0
      %1269 = vmatpush1.msra.mxu0 0.0
      %1270 = vmatprep.subr.mxu0 0.0
      %1271 = vmatpush1.msra.mxu0 0.0
      %1272 = vmatprep.subr.mxu0 0.0
      %1273 = vmatpush1.msra.mxu0 0.0
      %1274 = vmatprep.subr.mxu0 0.0
      %1275 = vmatpush1.msra.mxu0 0.0
      %1276 = vmatprep.subr.mxu0 0.0
      %1277 = vmatpush1.msra.mxu0 0.0
      %1278 = vmatprep.subr.mxu0 0.0
      %1279 = vmatpush1.msra.mxu0 0.0
      %1280 = vmatprep.subr.mxu0 0.0
      %1281 = vmatpush1.msra.mxu0 0.0
      %1282 = vmatprep.subr.mxu0 0.0
      %1283 = vmatpush1.msra.mxu0 0.0
      %1284 = vmatprep.subr.mxu0 0.0
      %1285 = vmatpush1.msra.mxu0 0.0
      %1286 = vmatprep.subr.mxu0 0.0
      %1287 = vmatpush1.msra.mxu0 0.0
      %1288 = vmatprep.subr.mxu0 0.0
      %1289 = vmatpush1.msra.mxu0 0.0
      %1290 = vmatprep.subr.mxu0 0.0
      %1291 = vmatpush1.msra.mxu0 0.0
      %1292 = vmatprep.subr.mxu0 0.0
      %1293 = vmatpush1.msra.mxu0 0.0
      %1294 = vmatprep.subr.mxu0 0.0
      %1295 = vmatpush1.msra.mxu0 0.0
      %1296 = vmatprep.subr.mxu0 0.0
      %1297 = vmatpush1.msra.mxu0 0.0
      %1298 = vmatprep.mubr.f32.mxu0 0.0
      %1299 = vmatmul.mubr.f32.gmra.mrb[0].mxu0 %v1232
      %v1300 = vpop.f32.mrb[0].mxu0
      %v1301 = vadd.f32 0.0, %v1300
      %v1302 = vpop.f32.mrb[0].mxu0
      %1303 = vdwg.mxu0
      %1304 = vmatprep.subr.mxu0 0.0
      %1305 = vmatpush1.msra.mxu0 %v283
      %1306 = vmatprep.subr.mxu0 0.0
      %1307 = vmatpush1.msra.mxu0 %v284
      %1308 = vmatprep.subr.mxu0 0.0
      %1309 = vmatpush1.msra.mxu0 %v285
      %1310 = vmatprep.subr.mxu0 0.0
      %1311 = vmatpush1.msra.mxu0 %v286
      %1312 = vmatprep.subr.mxu0 0.0
      %1313 = vmatpush1.msra.mxu0 %v287
      %1314 = vmatprep.subr.mxu0 0.0
      %1315 = vmatpush1.msra.mxu0 %v288
      %1316 = vmatprep.subr.mxu0 0.0
      %1317 = vmatpush1.msra.mxu0 %v289
      %1318 = vmatprep.subr.mxu0 0.0
      %1319 = vmatpush1.msra.mxu0 %v290
      %1320 = vmatprep.subr.mxu0 0.0
      %1321 = vmatpush1.msra.mxu0 0.0
      %1322 = vmatprep.subr.mxu0 0.0
      %1323 = vmatpush1.msra.mxu0 0.0
      %1324 = vmatprep.subr.mxu0 0.0
      %1325 = vmatpush1.msra.mxu0 0.0
      %1326 = vmatprep.subr.mxu0 0.0
      %1327 = vmatpush1.msra.mxu0 0.0
      %1328 = vmatprep.subr.mxu0 0.0
      %1329 = vmatpush1.msra.mxu0 0.0
      %1330 = vmatprep.subr.mxu0 0.0
      %1331 = vmatpush1.msra.mxu0 0.0
      %1332 = vmatprep.subr.mxu0 0.0
      %1333 = vmatpush1.msra.mxu0 0.0
      %1334 = vmatprep.subr.mxu0 0.0
      %1335 = vmatpush1.msra.mxu0 0.0
      %1336 = vmatprep.subr.mxu0 0.0
      %1337 = vmatpush1.msra.mxu0 0.0
      %1338 = vmatprep.subr.mxu0 0.0
      %1339 = vmatpush1.msra.mxu0 0.0
      %1340 = vmatprep.subr.mxu0 0.0
      %1341 = vmatpush1.msra.mxu0 0.0
      %1342 = vmatprep.subr.mxu0 0.0
      %1343 = vmatpush1.msra.mxu0 0.0
      %1344 = vmatprep.subr.mxu0 0.0
      %1345 = vmatpush1.msra.mxu0 0.0
      %1346 = vmatprep.subr.mxu0 0.0
      %1347 = vmatpush1.msra.mxu0 0.0
      %1348 = vmatprep.subr.mxu0 0.0
      %1349 = vmatpush1.msra.mxu0 0.0
      %1350 = vmatprep.subr.mxu0 0.0
      %1351 = vmatpush1.msra.mxu0 0.0
      %1352 = vmatprep.subr.mxu0 0.0
      %1353 = vmatpush1.msra.mxu0 0.0
      %1354 = vmatprep.subr.mxu0 0.0
      %1355 = vmatpush1.msra.mxu0 0.0
      %1356 = vmatprep.subr.mxu0 0.0
      %1357 = vmatpush1.msra.mxu0 0.0
      %1358 = vmatprep.subr.mxu0 0.0
      %1359 = vmatpush1.msra.mxu0 0.0
      %1360 = vmatprep.subr.mxu0 0.0
      %1361 = vmatpush1.msra.mxu0 0.0
      %1362 = vmatprep.subr.mxu0 0.0
      %1363 = vmatpush1.msra.mxu0 0.0
      %1364 = vmatprep.subr.mxu0 0.0
      %1365 = vmatpush1.msra.mxu0 0.0
      %1366 = vmatprep.subr.mxu0 0.0
      %1367 = vmatpush1.msra.mxu0 0.0
      %1368 = vmatprep.mubr.f32.mxu0 0.0
      %1369 = vmatmul.mubr.f32.gmra.mrb[0].mxu0 %v1232
      %v1370 = vpop.f32.mrb[0].mxu0
      %v1371 = vadd.f32 0.0, %v1370
      %v1372 = vpop.f32.mrb[0].mxu0
      %1373 = vdwg.mxu0
      %v1374 = vmul.f32 %v1149, %v1149
      %v1375 = vadd.f32 %v990, %v1374
      %v1376 = vmul.f32 %v1219, %v1219
      %v1377 = vadd.f32 %v1375, %v1376
      %v1378 = vmul.f32 %v1301, %v1301
      %v1379 = vadd.f32 %v994, %v1378
      %v1380 = vmul.f32 %v1371, %v1371
      %v1381 = vadd.f32 %v1379, %v1380
      %v1384 = vunpack.c.l.s4 1966171168
      %v1385 = vunpack.c.0.s8 %v1384
      %v1386 = vlaneseq
      %v1387 = vshrl.u32 %v1386, 7
      %v1388 = vsub.s32 %v1385, %v1387
      %v1389 = vrot.slane %v1149, %v1388
      %v1390 = vcombine.high %v1389, %v1389
      %v1392 = vunpack.c.l.s4 1966171168
      %v1393 = vunpack.c.0.s8 %v1392
      %v1394 = vlaneseq
      %v1395 = vshrl.u32 %v1394, 7
      %v1396 = vsub.s32 %v1393, %v1395
      %v1397 = vrot.slane %v1389, %v1396
      %v1399 = vunpack.c.l.s4 1966171168
      %v1400 = vunpack.c.0.s8 %v1399
      %v1401 = vlaneseq
      %v1402 = vshrl.u32 %v1401, 7
      %v1403 = vsub.s32 %v1400, %v1402
      %v1404 = vrot.slane %v1390, %v1403
      %v1405 = vlaneseq
      %v1406 = vshrl.u32 %v1405, 7
      %v1407 = vsub.s32 0, %v1406
      %v1408 = vrot.slane %v1397, %v1407
      %v1409 = vlaneseq
      %v1410 = vshrl.u32 %v1409, 7
      %v1411 = vsub.s32 0, %v1410
      %v1412 = vrot.slane %v1404, %v1411
      %v1415 = vmul.f32 %v1408, %v1301
      %v1416 = vmul.f32 %v1412, %v1301
      %v1417 = vadd.f32 %v1067, %v1415
      %v1418 = vadd.f32 %v1068, %v1416
      %v1421 = vunpack.c.l.s4 1966171168
      %v1422 = vunpack.c.0.s8 %v1421
      %v1423 = vlaneseq
      %v1424 = vshrl.u32 %v1423, 7
      %v1425 = vsub.s32 %v1422, %v1424
      %v1426 = vrot.slane %v1219, %v1425
      %v1427 = vcombine.high %v1426, %v1426
      %v1429 = vunpack.c.l.s4 1966171168
      %v1430 = vunpack.c.0.s8 %v1429
      %v1431 = vlaneseq
      %v1432 = vshrl.u32 %v1431, 7
      %v1433 = vsub.s32 %v1430, %v1432
      %v1434 = vrot.slane %v1426, %v1433
      %v1436 = vunpack.c.l.s4 1966171168
      %v1437 = vunpack.c.0.s8 %v1436
      %v1438 = vlaneseq
      %v1439 = vshrl.u32 %v1438, 7
      %v1440 = vsub.s32 %v1437, %v1439
      %v1441 = vrot.slane %v1427, %v1440
      %v1442 = vlaneseq
      %v1443 = vshrl.u32 %v1442, 7
      %v1444 = vsub.s32 0, %v1443
      %v1445 = vrot.slane %v1434, %v1444
      %v1446 = vlaneseq
      %v1447 = vshrl.u32 %v1446, 7
      %v1448 = vsub.s32 0, %v1447
      %v1449 = vrot.slane %v1441, %v1448
      %v1452 = vmul.f32 %v1445, %v1371
      %v1453 = vmul.f32 %v1449, %v1371
      %v1454 = vadd.f32 %v1417, %v1452
      %v1455 = vadd.f32 %v1418, %v1453
      %v1456 = vmul.f32 %v1445, %v1301
      %v1457 = vmul.f32 %v1449, %v1301
      %v1458 = vadd.f32 %v1075, %v1456
      %v1459 = vadd.f32 %v1076, %v1457
      %v1460 = vmul.f32 %v1408, %v1371
      %v1461 = vmul.f32 %v1412, %v1371
      %v1462 = vsub.f32 %v1458, %v1460
      %v1463 = vsub.f32 %v1459, %v1461
      %v1464 = vrot.slane %v265, 3
      %v1465 = vrot.slane %v266, 2
      %v1466 = vsel %vm294, %v1465, %v1464
      %v1467 = vsel %vm296, %v1466, 0
      %1469 = vmatprep.subr.mxu0 0.0
      %1470 = vmatpush1.msra.mxu0 %v275
      %1471 = vmatprep.subr.mxu0 0.0
      %1472 = vmatpush1.msra.mxu0 %v276
      %1473 = vmatprep.subr.mxu0 0.0
      %1474 = vmatpush1.msra.mxu0 %v277
      %1475 = vmatprep.subr.mxu0 0.0
      %1476 = vmatpush1.msra.mxu0 %v278
      %1477 = vmatprep.subr.mxu0 0.0
      %1478 = vmatpush1.msra.mxu0 %v279
      %1479 = vmatprep.subr.mxu0 0.0
      %1480 = vmatpush1.msra.mxu0 %v280
      %1481 = vmatprep.subr.mxu0 0.0
      %1482 = vmatpush1.msra.mxu0 %v281
      %1483 = vmatprep.subr.mxu0 0.0
      %1484 = vmatpush1.msra.mxu0 %v282
      %1485 = vmatprep.subr.mxu0 0.0
      %1486 = vmatpush1.msra.mxu0 0.0
      %1487 = vmatprep.subr.mxu0 0.0
      %1488 = vmatpush1.msra.mxu0 0.0
      %1489 = vmatprep.subr.mxu0 0.0
      %1490 = vmatpush1.msra.mxu0 0.0
      %1491 = vmatprep.subr.mxu0 0.0
      %1492 = vmatpush1.msra.mxu0 0.0
      %1493 = vmatprep.subr.mxu0 0.0
      %1494 = vmatpush1.msra.mxu0 0.0
      %1495 = vmatprep.subr.mxu0 0.0
      %1496 = vmatpush1.msra.mxu0 0.0
      %1497 = vmatprep.subr.mxu0 0.0
      %1498 = vmatpush1.msra.mxu0 0.0
      %1499 = vmatprep.subr.mxu0 0.0
      %1500 = vmatpush1.msra.mxu0 0.0
      %1501 = vmatprep.subr.mxu0 0.0
      %1502 = vmatpush1.msra.mxu0 0.0
      %1503 = vmatprep.subr.mxu0 0.0
      %1504 = vmatpush1.msra.mxu0 0.0
      %1505 = vmatprep.subr.mxu0 0.0
      %1506 = vmatpush1.msra.mxu0 0.0
      %1507 = vmatprep.subr.mxu0 0.0
      %1508 = vmatpush1.msra.mxu0 0.0
      %1509 = vmatprep.subr.mxu0 0.0
      %1510 = vmatpush1.msra.mxu0 0.0
      %1511 = vmatprep.subr.mxu0 0.0
      %1512 = vmatpush1.msra.mxu0 0.0
      %1513 = vmatprep.subr.mxu0 0.0
      %1514 = vmatpush1.msra.mxu0 0.0
      %1515 = vmatprep.subr.mxu0 0.0
      %1516 = vmatpush1.msra.mxu0 0.0
      %1517 = vmatprep.subr.mxu0 0.0
      %1518 = vmatpush1.msra.mxu0 0.0
      %1519 = vmatprep.subr.mxu0 0.0
      %1520 = vmatpush1.msra.mxu0 0.0
      %1521 = vmatprep.subr.mxu0 0.0
      %1522 = vmatpush1.msra.mxu0 0.0
      %1523 = vmatprep.subr.mxu0 0.0
      %1524 = vmatpush1.msra.mxu0 0.0
      %1525 = vmatprep.subr.mxu0 0.0
      %1526 = vmatpush1.msra.mxu0 0.0
      %1527 = vmatprep.subr.mxu0 0.0
      %1528 = vmatpush1.msra.mxu0 0.0
      %1529 = vmatprep.subr.mxu0 0.0
      %1530 = vmatpush1.msra.mxu0 0.0
      %1531 = vmatprep.subr.mxu0 0.0
      %1532 = vmatpush1.msra.mxu0 0.0
      %1533 = vmatprep.mubr.f32.mxu0 0.0
      %1534 = vmatmul.mubr.f32.gmra.mrb[0].mxu0 %v1467
      %v1535 = vpop.f32.mrb[0].mxu0
      %v1536 = vadd.f32 0.0, %v1535
      %v1537 = vpop.f32.mrb[0].mxu0
      %1538 = vdwg.mxu0
      %1539 = vmatprep.subr.mxu0 0.0
      %1540 = vmatpush1.msra.mxu0 %v283
      %1541 = vmatprep.subr.mxu0 0.0
      %1542 = vmatpush1.msra.mxu0 %v284
      %1543 = vmatprep.subr.mxu0 0.0
      %1544 = vmatpush1.msra.mxu0 %v285
      %1545 = vmatprep.subr.mxu0 0.0
      %1546 = vmatpush1.msra.mxu0 %v286
      %1547 = vmatprep.subr.mxu0 0.0
      %1548 = vmatpush1.msra.mxu0 %v287
      %1549 = vmatprep.subr.mxu0 0.0
      %1550 = vmatpush1.msra.mxu0 %v288
      %1551 = vmatprep.subr.mxu0 0.0
      %1552 = vmatpush1.msra.mxu0 %v289
      %1553 = vmatprep.subr.mxu0 0.0
      %1554 = vmatpush1.msra.mxu0 %v290
      %1555 = vmatprep.subr.mxu0 0.0
      %1556 = vmatpush1.msra.mxu0 0.0
      %1557 = vmatprep.subr.mxu0 0.0
      %1558 = vmatpush1.msra.mxu0 0.0
      %1559 = vmatprep.subr.mxu0 0.0
      %1560 = vmatpush1.msra.mxu0 0.0
      %1561 = vmatprep.subr.mxu0 0.0
      %1562 = vmatpush1.msra.mxu0 0.0
      %1563 = vmatprep.subr.mxu0 0.0
      %1564 = vmatpush1.msra.mxu0 0.0
      %1565 = vmatprep.subr.mxu0 0.0
      %1566 = vmatpush1.msra.mxu0 0.0
      %1567 = vmatprep.subr.mxu0 0.0
      %1568 = vmatpush1.msra.mxu0 0.0
      %1569 = vmatprep.subr.mxu0 0.0
      %1570 = vmatpush1.msra.mxu0 0.0
      %1571 = vmatprep.subr.mxu0 0.0
      %1572 = vmatpush1.msra.mxu0 0.0
      %1573 = vmatprep.subr.mxu0 0.0
      %1574 = vmatpush1.msra.mxu0 0.0
      %1575 = vmatprep.subr.mxu0 0.0
      %1576 = vmatpush1.msra.mxu0 0.0
      %1577 = vmatprep.subr.mxu0 0.0
      %1578 = vmatpush1.msra.mxu0 0.0
      %1579 = vmatprep.subr.mxu0 0.0
      %1580 = vmatpush1.msra.mxu0 0.0
      %1581 = vmatprep.subr.mxu0 0.0
      %1582 = vmatpush1.msra.mxu0 0.0
      %1583 = vmatprep.subr.mxu0 0.0
      %1584 = vmatpush1.msra.mxu0 0.0
      %1585 = vmatprep.subr.mxu0 0.0
      %1586 = vmatpush1.msra.mxu0 0.0
      %1587 = vmatprep.subr.mxu0 0.0
      %1588 = vmatpush1.msra.mxu0 0.0
      %1589 = vmatprep.subr.mxu0 0.0
      %1590 = vmatpush1.msra.mxu0 0.0
      %1591 = vmatprep.subr.mxu0 0.0
      %1592 = vmatpush1.msra.mxu0 0.0
      %1593 = vmatprep.subr.mxu0 0.0
      %1594 = vmatpush1.msra.mxu0 0.0
      %1595 = vmatprep.subr.mxu0 0.0
      %1596 = vmatpush1.msra.mxu0 0.0
      %1597 = vmatprep.subr.mxu0 0.0
      %1598 = vmatpush1.msra.mxu0 0.0
      %1599 = vmatprep.subr.mxu0 0.0
      %1600 = vmatpush1.msra.mxu0 0.0
      %1601 = vmatprep.subr.mxu0 0.0
      %1602 = vmatpush1.msra.mxu0 0.0
      %1603 = vmatprep.mubr.f32.mxu0 0.0
      %1604 = vmatmul.mubr.f32.gmra.mrb[0].mxu0 %v1467
      %v1605 = vpop.f32.mrb[0].mxu0
      %v1606 = vadd.f32 0.0, %v1605
      %v1607 = vpop.f32.mrb[0].mxu0
      %1608 = vdwg.mxu0
      %v1609 = vrot.slane %v267, 3
      %v1610 = vrot.slane %v268, 2
      %v1611 = vsel %vm294, %v1610, %v1609
      %v1612 = vrot.slane %v269, 1
      %v1613 = vsel %vm448, %v1612, %v1611
      %v1614 = vsel %vm451, %v270, %v1613
      %v1615 = vrot.slane %v271, 7
      %v1616 = vsel %vm454, %v1615, %v1614
      %v1617 = vrot.slane %v272, 6
      %v1618 = vsel %vm457, %v1617, %v1616
      %v1619 = vsel %vm296, %v1618, 0
      %1621 = vmatprep.subr.mxu0 0.0
      %1622 = vmatpush1.msra.mxu0 %v275
      %1623 = vmatprep.subr.mxu0 0.0
      %1624 = vmatpush1.msra.mxu0 %v276
      %1625 = vmatprep.subr.mxu0 0.0
      %1626 = vmatpush1.msra.mxu0 %v277
      %1627 = vmatprep.subr.mxu0 0.0
      %1628 = vmatpush1.msra.mxu0 %v278
      %1629 = vmatprep.subr.mxu0 0.0
      %1630 = vmatpush1.msra.mxu0 %v279
      %1631 = vmatprep.subr.mxu0 0.0
      %1632 = vmatpush1.msra.mxu0 %v280
      %1633 = vmatprep.subr.mxu0 0.0
      %1634 = vmatpush1.msra.mxu0 %v281
      %1635 = vmatprep.subr.mxu0 0.0
      %1636 = vmatpush1.msra.mxu0 %v282
      %1637 = vmatprep.subr.mxu0 0.0
      %1638 = vmatpush1.msra.mxu0 0.0
      %1639 = vmatprep.subr.mxu0 0.0
      %1640 = vmatpush1.msra.mxu0 0.0
      %1641 = vmatprep.subr.mxu0 0.0
      %1642 = vmatpush1.msra.mxu0 0.0
      %1643 = vmatprep.subr.mxu0 0.0
      %1644 = vmatpush1.msra.mxu0 0.0
      %1645 = vmatprep.subr.mxu0 0.0
      %1646 = vmatpush1.msra.mxu0 0.0
      %1647 = vmatprep.subr.mxu0 0.0
      %1648 = vmatpush1.msra.mxu0 0.0
      %1649 = vmatprep.subr.mxu0 0.0
      %1650 = vmatpush1.msra.mxu0 0.0
      %1651 = vmatprep.subr.mxu0 0.0
      %1652 = vmatpush1.msra.mxu0 0.0
      %1653 = vmatprep.subr.mxu0 0.0
      %1654 = vmatpush1.msra.mxu0 0.0
      %1655 = vmatprep.subr.mxu0 0.0
      %1656 = vmatpush1.msra.mxu0 0.0
      %1657 = vmatprep.subr.mxu0 0.0
      %1658 = vmatpush1.msra.mxu0 0.0
      %1659 = vmatprep.subr.mxu0 0.0
      %1660 = vmatpush1.msra.mxu0 0.0
      %1661 = vmatprep.subr.mxu0 0.0
      %1662 = vmatpush1.msra.mxu0 0.0
      %1663 = vmatprep.subr.mxu0 0.0
      %1664 = vmatpush1.msra.mxu0 0.0
      %1665 = vmatprep.subr.mxu0 0.0
      %1666 = vmatpush1.msra.mxu0 0.0
      %1667 = vmatprep.subr.mxu0 0.0
      %1668 = vmatpush1.msra.mxu0 0.0
      %1669 = vmatprep.subr.mxu0 0.0
      %1670 = vmatpush1.msra.mxu0 0.0
      %1671 = vmatprep.subr.mxu0 0.0
      %1672 = vmatpush1.msra.mxu0 0.0
      %1673 = vmatprep.subr.mxu0 0.0
      %1674 = vmatpush1.msra.mxu0 0.0
      %1675 = vmatprep.subr.mxu0 0.0
      %1676 = vmatpush1.msra.mxu0 0.0
      %1677 = vmatprep.subr.mxu0 0.0
      %1678 = vmatpush1.msra.mxu0 0.0
      %1679 = vmatprep.subr.mxu0 0.0
      %1680 = vmatpush1.msra.mxu0 0.0
      %1681 = vmatprep.subr.mxu0 0.0
      %1682 = vmatpush1.msra.mxu0 0.0
      %1683 = vmatprep.subr.mxu0 0.0
      %1684 = vmatpush1.msra.mxu0 0.0
      %1685 = vmatprep.mubr.f32.mxu0 0.0
      %1686 = vmatmul.mubr.f32.gmra.mrb[0].mxu0 %v1619
      %v1687 = vpop.f32.mrb[0].mxu0
      %v1688 = vadd.f32 0.0, %v1687
      %v1689 = vpop.f32.mrb[0].mxu0
      %1690 = vdwg.mxu0
      %1691 = vmatprep.subr.mxu0 0.0
      %1692 = vmatpush1.msra.mxu0 %v283
      %1693 = vmatprep.subr.mxu0 0.0
      %1694 = vmatpush1.msra.mxu0 %v284
      %1695 = vmatprep.subr.mxu0 0.0
      %1696 = vmatpush1.msra.mxu0 %v285
      %1697 = vmatprep.subr.mxu0 0.0
      %1698 = vmatpush1.msra.mxu0 %v286
      %1699 = vmatprep.subr.mxu0 0.0
      %1700 = vmatpush1.msra.mxu0 %v287
      %1701 = vmatprep.subr.mxu0 0.0
      %1702 = vmatpush1.msra.mxu0 %v288
      %1703 = vmatprep.subr.mxu0 0.0
      %1704 = vmatpush1.msra.mxu0 %v289
      %1705 = vmatprep.subr.mxu0 0.0
      %1706 = vmatpush1.msra.mxu0 %v290
      %1707 = vmatprep.subr.mxu0 0.0
      %1708 = vmatpush1.msra.mxu0 0.0
      %1709 = vmatprep.subr.mxu0 0.0
      %1710 = vmatpush1.msra.mxu0 0.0
      %1711 = vmatprep.subr.mxu0 0.0
      %1712 = vmatpush1.msra.mxu0 0.0
      %1713 = vmatprep.subr.mxu0 0.0
      %1714 = vmatpush1.msra.mxu0 0.0
      %1715 = vmatprep.subr.mxu0 0.0
      %1716 = vmatpush1.msra.mxu0 0.0
      %1717 = vmatprep.subr.mxu0 0.0
      %1718 = vmatpush1.msra.mxu0 0.0
      %1719 = vmatprep.subr.mxu0 0.0
      %1720 = vmatpush1.msra.mxu0 0.0
      %1721 = vmatprep.subr.mxu0 0.0
      %1722 = vmatpush1.msra.mxu0 0.0
      %1723 = vmatprep.subr.mxu0 0.0
      %1724 = vmatpush1.msra.mxu0 0.0
      %1725 = vmatprep.subr.mxu0 0.0
      %1726 = vmatpush1.msra.mxu0 0.0
      %1727 = vmatprep.subr.mxu0 0.0
      %1728 = vmatpush1.msra.mxu0 0.0
      %1729 = vmatprep.subr.mxu0 0.0
      %1730 = vmatpush1.msra.mxu0 0.0
      %1731 = vmatprep.subr.mxu0 0.0
      %1732 = vmatpush1.msra.mxu0 0.0
      %1733 = vmatprep.subr.mxu0 0.0
      %1734 = vmatpush1.msra.mxu0 0.0
      %1735 = vmatprep.subr.mxu0 0.0
      %1736 = vmatpush1.msra.mxu0 0.0
      %1737 = vmatprep.subr.mxu0 0.0
      %1738 = vmatpush1.msra.mxu0 0.0
      %1739 = vmatprep.subr.mxu0 0.0
      %1740 = vmatpush1.msra.mxu0 0.0
      %1741 = vmatprep.subr.mxu0 0.0
      %1742 = vmatpush1.msra.mxu0 0.0
      %1743 = vmatprep.subr.mxu0 0.0
      %1744 = vmatpush1.msra.mxu0 0.0
      %1745 = vmatprep.subr.mxu0 0.0
      %1746 = vmatpush1.msra.mxu0 0.0
      %1747 = vmatprep.subr.mxu0 0.0
      %1748 = vmatpush1.msra.mxu0 0.0
      %1749 = vmatprep.subr.mxu0 0.0
      %1750 = vmatpush1.msra.mxu0 0.0
      %1751 = vmatprep.subr.mxu0 0.0
      %1752 = vmatpush1.msra.mxu0 0.0
      %1753 = vmatprep.subr.mxu0 0.0
      %1754 = vmatpush1.msra.mxu0 0.0
      %1755 = vmatprep.mubr.f32.mxu0 0.0
      %1756 = vmatmul.mubr.f32.gmra.mrb[0].mxu0 %v1619
      %v1757 = vpop.f32.mrb[0].mxu0
      %v1758 = vadd.f32 0.0, %v1757
      %v1759 = vpop.f32.mrb[0].mxu0
      %1760 = vdwg.mxu0
      %v1761 = vmul.f32 %v1536, %v1536
      %v1762 = vadd.f32 %v1377, %v1761
      %v1763 = vmul.f32 %v1606, %v1606
      %v1764 = vadd.f32 %v1762, %v1763
      %v1765 = vmul.f32 %v1688, %v1688
      %v1766 = vadd.f32 %v1381, %v1765
      %v1767 = vmul.f32 %v1758, %v1758
      %v1768 = vadd.f32 %v1766, %v1767
      %v1771 = vunpack.c.l.s4 1966171168
      %v1772 = vunpack.c.0.s8 %v1771
      %v1773 = vlaneseq
      %v1774 = vshrl.u32 %v1773, 7
      %v1775 = vsub.s32 %v1772, %v1774
      %v1776 = vrot.slane %v1536, %v1775
      %v1777 = vcombine.high %v1776, %v1776
      %v1779 = vunpack.c.l.s4 1966171168
      %v1780 = vunpack.c.0.s8 %v1779
      %v1781 = vlaneseq
      %v1782 = vshrl.u32 %v1781, 7
      %v1783 = vsub.s32 %v1780, %v1782
      %v1784 = vrot.slane %v1776, %v1783
      %v1786 = vunpack.c.l.s4 1966171168
      %v1787 = vunpack.c.0.s8 %v1786
      %v1788 = vlaneseq
      %v1789 = vshrl.u32 %v1788, 7
      %v1790 = vsub.s32 %v1787, %v1789
      %v1791 = vrot.slane %v1777, %v1790
      %v1792 = vlaneseq
      %v1793 = vshrl.u32 %v1792, 7
      %v1794 = vsub.s32 0, %v1793
      %v1795 = vrot.slane %v1784, %v1794
      %v1796 = vlaneseq
      %v1797 = vshrl.u32 %v1796, 7
      %v1798 = vsub.s32 0, %v1797
      %v1799 = vrot.slane %v1791, %v1798
      %v1802 = vmul.f32 %v1795, %v1688
      %v1803 = vmul.f32 %v1799, %v1688
      %v1804 = vadd.f32 %v1454, %v1802
      %v1805 = vadd.f32 %v1455, %v1803
      %v1808 = vunpack.c.l.s4 1966171168
      %v1809 = vunpack.c.0.s8 %v1808
      %v1810 = vlaneseq
      %v1811 = vshrl.u32 %v1810, 7
      %v1812 = vsub.s32 %v1809, %v1811
      %v1813 = vrot.slane %v1606, %v1812
      %v1814 = vcombine.high %v1813, %v1813
      %v1816 = vunpack.c.l.s4 1966171168
      %v1817 = vunpack.c.0.s8 %v1816
      %v1818 = vlaneseq
      %v1819 = vshrl.u32 %v1818, 7
      %v1820 = vsub.s32 %v1817, %v1819
      %v1821 = vrot.slane %v1813, %v1820
      %v1823 = vunpack.c.l.s4 1966171168
      %v1824 = vunpack.c.0.s8 %v1823
      %v1825 = vlaneseq
      %v1826 = vshrl.u32 %v1825, 7
      %v1827 = vsub.s32 %v1824, %v1826
      %v1828 = vrot.slane %v1814, %v1827
      %v1829 = vlaneseq
      %v1830 = vshrl.u32 %v1829, 7
      %v1831 = vsub.s32 0, %v1830
      %v1832 = vrot.slane %v1821, %v1831
      %v1833 = vlaneseq
      %v1834 = vshrl.u32 %v1833, 7
      %v1835 = vsub.s32 0, %v1834
      %v1836 = vrot.slane %v1828, %v1835
      %v1839 = vmul.f32 %v1832, %v1758
      %v1840 = vmul.f32 %v1836, %v1758
      %v1841 = vadd.f32 %v1804, %v1839
      %v1842 = vadd.f32 %v1805, %v1840
      %v1843 = vmul.f32 %v1832, %v1688
      %v1844 = vmul.f32 %v1836, %v1688
      %v1845 = vadd.f32 %v1462, %v1843
      %v1846 = vadd.f32 %v1463, %v1844
      %v1847 = vmul.f32 %v1795, %v1758
      %v1848 = vmul.f32 %v1799, %v1758
      %v1849 = vsub.f32 %v1845, %v1847
      %v1850 = vsub.f32 %v1846, %v1848
      %v1853 = vunpack.c.l.s4 1966171168
      %v1854 = vunpack.c.0.s8 %v1853
      %v1855 = vlaneseq
      %v1856 = vshrl.u32 %v1855, 7
      %v1857 = vsub.s32 %v1854, %v1856
      %v1858 = vrot.slane %v1764, %v1857
      %v1859 = vcombine.high %v1858, %v1858
      %v1861 = vunpack.c.l.s4 1966171168
      %v1862 = vunpack.c.0.s8 %v1861
      %v1863 = vlaneseq
      %v1864 = vshrl.u32 %v1863, 7
      %v1865 = vsub.s32 %v1862, %v1864
      %v1866 = vrot.slane %v1858, %v1865
      %v1868 = vunpack.c.l.s4 1966171168
      %v1869 = vunpack.c.0.s8 %v1868
      %v1870 = vlaneseq
      %v1871 = vshrl.u32 %v1870, 7
      %v1872 = vsub.s32 %v1869, %v1871
      %v1873 = vrot.slane %v1859, %v1872
      %v1874 = vlaneseq
      %v1875 = vshrl.u32 %v1874, 7
      %v1876 = vsub.s32 0, %v1875
      %v1877 = vrot.slane %v1866, %v1876
      %v1878 = vlaneseq
      %v1879 = vshrl.u32 %v1878, 7
      %v1880 = vsub.s32 0, %v1879
      %v1881 = vrot.slane %v1873, %v1880
      %v1884 = vmul.f32 %v1877, %v1768
      %v1885 = vmul.f32 %v1881, %v1768
      %v1886 = vadd.f32 %v1884, 1e-12
      %v1887 = vadd.f32 %v1885, 1e-12
      %v1888 = vmul.f32 %v1841, %v1841
      %v1889 = vmul.f32 %v1842, %v1842
      %v1890 = vmul.f32 %v1849, %v1849
      %v1891 = vmul.f32 %v1850, %v1850
      %v1892 = vadd.f32 %v1888, %v1890
      %v1893 = vadd.f32 %v1889, %v1891
      %v1894 = vrcp.pop %v1886
      %v1895 = vmul.f32 %v1892, %v1894
      %v1896 = vrcp.pop %v1887
      %v1897 = vmul.f32 %v1893, %v1896
      %vm1898 = vcmask 267264
      %v1899 = vsel %vm1898, %v1895, 0.0
      %1900 = vadd.xlane.f32.xlu0 %v1899
      %v1901 = vpop.xlane.xlu0 %1900
      %v1902 = vsel %vm1898, %v1897, 0.0
      %1903 = vadd.xlane.f32.xlu0 %v1902
      %v1904 = vpop.xlane.xlu0 %1903
      %v1905 = vrcp.pop 33.0
      %v1906 = vmul.f32 %v1901, %v1905
      %v1907 = vmul.f32 %v1904, %v1905
      %v1908 = vlaneseq
      %v1909 = vand.u32 %v1908, 127
      %v1912 = vlaneseq
      %v1913 = vshrl.u32 %v1912, 7
      %v1914 = vsub.s32 %v1909, %v1913
      %v1915 = vrot.slane %v1906, %v1914
      %v1916 = vlaneseq
      %v1917 = vshrl.u32 %v1916, 7
      %v1918 = vsub.s32 %v1909, %v1917
      %v1919 = vrot.slane %v1907, %v1918
      %v1920 = vsel %vm294, %v1919, %v1915
      %vm1922 = vcmask 41984
      %v1923 = vsel %vm1922, %v1920, -inf
      %1924 = vmax.xlane.f32.xlu0 %v1923
      %v1925 = vpop.xlane.xlu0 %1924
      %v1927 = vlaneseq
      %v1928 = vshrl.u32 %v1927, 7
      %v1929 = vsub.s32 0, %v1928
      %v1930 = vrot.slane %v1925, %v1929
      %v1931 = vlaneseq
      %v1932 = vshrl.u32 %v1931, 7
      %v1933 = vsub.s32 1, %v1932
      %v1934 = vrot.slane %v1925, %v1933
      %vm1937 = vcmp.eq.f32.partialorder %v1906, %v1930
      %vm1938 = vcmp.eq.f32.partialorder %v1907, %v1934
      %1940 = vbcast.lane.b32.xlu0 %v1909, 256
      %v1941 = vpop.permute.xlu0 %1940
      %v1942 = vsel %vm1937, %v1941, 6
      %v1943 = vsel %vm1938, %v1941, 6
      %1944 = vset.pattern.permute.xlu0 0
      %1945 = vperm.xlu0 %1944, %v1942
      %v1946 = vpop.permute.xlu0 %1945
      %1947 = vset.pattern.permute.xlu0 0
      %1948 = vperm.xlu0 %1947, %v1943
      %v1949 = vpop.permute.xlu0 %1948
      %v1950 = vlaneseq
      %v1951 = vshrl.u32 %v1950, 7
      %v1952 = vsub.s32 %v1909, %v1951
      %v1953 = vrot.slane %v1946, %v1952
      %v1954 = vlaneseq
      %v1955 = vshrl.u32 %v1954, 7
      %v1956 = vsub.s32 %v1909, %v1955
      %v1957 = vrot.slane %v1949, %v1956
      %v1958 = vsel %vm294, %v1957, %v1953
      %v1959 = vsel %vm1922, %v1958, 2147483647
      %v1960 = vand.u32 %v1959, 65535
      %v1961 = vshra.s32 %v1959, 16
      %v1962 = vcvt.s32.f32 %v1960
      %v1963 = vcvt.s32.f32 %v1961
      %1964 = vmin.xlane.f32.xlu0 %v1963
      %v1965 = vpop.xlane.xlu0 %1964
      %vm1966 = vcmp.eq.f32.partialorder %v1963, %v1965
      %v1967 = vsel %vm1966, %v1962, inf
      %1968 = vmin.xlane.f32.xlu0 %v1967
      %v1969 = vpop.xlane.xlu0 %1968
      %v1970 = vcvt.f32.s32 %v1969
      %v1971 = vcvt.f32.s32 %v1965
      %v1972 = vshll.u32 %v1971, 16
      %v1973 = vadd.s32 %v1972, %v1970
      %vm1974 = vcmp.eq.s32.totalorder %v1909, %v1973
      %v1975 = vsel %vm1974, 1, 0
      %v1976 = vcvt.s32.f32 %v1975
      %vm1977 = vcmask 48128
      %v1979 = vsel %vm1977, %v1976, 0
      %vm1981 = vcmask 1045504
      %v1983 = vsel %vm1981, %v273, 0
      %v1986 = vsel %vm1981, %v274, 0
      %1988 = vmatprep.subr.mxu0 %v1986
      %1989 = vmatpush1.msra.mxu0 %v1983
      %1990 = vmatprep.subr.mxu0 0.0
      %1991 = vmatpush1.msra.mxu0 0.0
      %1992 = vmatprep.subr.mxu0 0.0
      %1993 = vmatpush1.msra.mxu0 0.0
      %1994 = vmatprep.subr.mxu0 0.0
      %1995 = vmatpush1.msra.mxu0 0.0
      %1996 = vmatprep.subr.mxu0 0.0
      %1997 = vmatpush1.msra.mxu0 0.0
      %1998 = vmatprep.subr.mxu0 0.0
      %1999 = vmatpush1.msra.mxu0 0.0
      %2000 = vmatprep.subr.mxu0 0.0
      %2001 = vmatpush1.msra.mxu0 0.0
      %2002 = vmatprep.subr.mxu0 0.0
      %2003 = vmatpush1.msra.mxu0 0.0
      %2004 = vmatprep.subr.mxu0 0.0
      %2005 = vmatpush1.msra.mxu0 0.0
      %2006 = vmatprep.subr.mxu0 0.0
      %2007 = vmatpush1.msra.mxu0 0.0
      %2008 = vmatprep.subr.mxu0 0.0
      %2009 = vmatpush1.msra.mxu0 0.0
      %2010 = vmatprep.subr.mxu0 0.0
      %2011 = vmatpush1.msra.mxu0 0.0
      %2012 = vmatprep.subr.mxu0 0.0
      %2013 = vmatpush1.msra.mxu0 0.0
      %2014 = vmatprep.subr.mxu0 0.0
      %2015 = vmatpush1.msra.mxu0 0.0
      %2016 = vmatprep.subr.mxu0 0.0
      %2017 = vmatpush1.msra.mxu0 0.0
      %2018 = vmatprep.subr.mxu0 0.0
      %2019 = vmatpush1.msra.mxu0 0.0
      %2020 = vmatprep.subr.mxu0 0.0
      %2021 = vmatpush1.msra.mxu0 0.0
      %2022 = vmatprep.subr.mxu0 0.0
      %2023 = vmatpush1.msra.mxu0 0.0
      %2024 = vmatprep.subr.mxu0 0.0
      %2025 = vmatpush1.msra.mxu0 0.0
      %2026 = vmatprep.subr.mxu0 0.0
      %2027 = vmatpush1.msra.mxu0 0.0
      %2028 = vmatprep.subr.mxu0 0.0
      %2029 = vmatpush1.msra.mxu0 0.0
      %2030 = vmatprep.subr.mxu0 0.0
      %2031 = vmatpush1.msra.mxu0 0.0
      %2032 = vmatprep.subr.mxu0 0.0
      %2033 = vmatpush1.msra.mxu0 0.0
      %2034 = vmatprep.subr.mxu0 0.0
      %2035 = vmatpush1.msra.mxu0 0.0
      %2036 = vmatprep.subr.mxu0 0.0
      %2037 = vmatpush1.msra.mxu0 0.0
      %2038 = vmatprep.subr.mxu0 0.0
      %2039 = vmatpush1.msra.mxu0 0.0
      %2040 = vmatprep.subr.mxu0 0.0
      %2041 = vmatpush1.msra.mxu0 0.0
      %2042 = vmatprep.subr.mxu0 0.0
      %2043 = vmatpush1.msra.mxu0 0.0
      %2044 = vmatprep.subr.mxu0 0.0
      %2045 = vmatpush1.msra.mxu0 0.0
      %2046 = vmatprep.subr.mxu0 0.0
      %2047 = vmatpush1.msra.mxu0 0.0
      %2048 = vmatprep.subr.mxu0 0.0
      %2049 = vmatpush1.msra.mxu0 0.0
      %2050 = vmatprep.subr.mxu0 0.0
      %2051 = vmatpush1.msra.mxu0 0.0
      %2052 = vmatprep.mubr.f32.mxu0 0.0
      %2053 = vmatmul.mubr.f32.gmra.mrb[0].mxu0 %v1979
      %v2054 = vpop.f32.mrb[0].mxu0
      %v2055 = vadd.f32 0.0, %v2054
      %v2056 = vpop.f32.mrb[0].mxu0
      %v2057 = vadd.f32 0.0, %v2056
      %2058 = vdwg.mxu0
      %v2061 = vcombine.low %v2055, %v2057
      %v2063 = vunpack.c.l.s4 1966171168
      %v2064 = vunpack.c.0.s8 %v2063
      %v2065 = vlaneseq
      %v2066 = vshrl.u32 %v2065, 7
      %v2067 = vsub.s32 %v2064, %v2066
      %v2068 = vrot.slane %v2061, %v2067
      %v2069 = vcombine.high %v2068, %v2068
      %v2071 = vunpack.c.l.s4 1966171168
      %v2072 = vunpack.c.0.s8 %v2071
      %v2073 = vlaneseq
      %v2074 = vshrl.u32 %v2073, 7
      %v2075 = vsub.s32 %v2072, %v2074
      %v2076 = vrot.slane %v2068, %v2075
      %v2078 = vunpack.c.l.s4 1966171168
      %v2079 = vunpack.c.0.s8 %v2078
      %v2080 = vlaneseq
      %v2081 = vshrl.u32 %v2080, 7
      %v2082 = vsub.s32 %v2079, %v2081
      %v2083 = vrot.slane %v2069, %v2082
      %v2086 = vlaneseq
      %vm2087 = vcmp.ge.s32.totalorder %v2086, 0
      %vm2088 = vcmp.lt.s32.totalorder %v2086, 256
      %vm2089 = vmand %vm2087, %vm2088
      %2090 = vst.msk [vmem:[%s264] ss:$4 sm:$0x3] %vm2089, %v2076
      %s2091 = scalar_lea.vmem %s264, 8
      %2092 = vst.msk [vmem:[%s2091] ss:$4 sm:$0x3] %vm2089, %v2083
      %v2093 = vsel %vm1974, -inf, %v1920
      %v2094 = vsel %vm1922, %v2093, -inf
      %2095 = vmax.xlane.f32.xlu0 %v2094
      %v2096 = vpop.xlane.xlu0 %2095
      %vm2097 = vcmp.eq.f32.partialorder %v2093, %v2096
      %v2098 = vsel %vm2097, %v1909, 6
      %v2099 = vsel %vm1922, %v2098, 2147483647
      %v2100 = vand.u32 %v2099, 65535
      %v2101 = vshra.s32 %v2099, 16
      %v2102 = vcvt.s32.f32 %v2100
      %v2103 = vcvt.s32.f32 %v2101
      %2104 = vmin.xlane.f32.xlu0 %v2103
      %v2105 = vpop.xlane.xlu0 %2104
      %vm2106 = vcmp.eq.f32.partialorder %v2103, %v2105
      %v2107 = vsel %vm2106, %v2102, inf
      %2108 = vmin.xlane.f32.xlu0 %v2107
      %v2109 = vpop.xlane.xlu0 %2108
      %v2110 = vcvt.f32.s32 %v2109
      %v2111 = vcvt.f32.s32 %v2105
      %v2112 = vshll.u32 %v2111, 16
      %v2113 = vadd.s32 %v2112, %v2110
      %vm2114 = vcmp.eq.s32.totalorder %v1909, %v2113
      %v2115 = vsel %vm2114, 1, 0
      %v2116 = vcvt.s32.f32 %v2115
      %v2118 = vsel %vm1977, %v2116, 0
      %2120 = vmatprep.subr.mxu0 %v1986
      %2121 = vmatpush1.msra.mxu0 %v1983
      %2122 = vmatprep.subr.mxu0 0.0
      %2123 = vmatpush1.msra.mxu0 0.0
      %2124 = vmatprep.subr.mxu0 0.0
      %2125 = vmatpush1.msra.mxu0 0.0
      %2126 = vmatprep.subr.mxu0 0.0
      %2127 = vmatpush1.msra.mxu0 0.0
      %2128 = vmatprep.subr.mxu0 0.0
      %2129 = vmatpush1.msra.mxu0 0.0
      %2130 = vmatprep.subr.mxu0 0.0
      %2131 = vmatpush1.msra.mxu0 0.0
      %2132 = vmatprep.subr.mxu0 0.0
      %2133 = vmatpush1.msra.mxu0 0.0
      %2134 = vmatprep.subr.mxu0 0.0
      %2135 = vmatpush1.msra.mxu0 0.0
      %2136 = vmatprep.subr.mxu0 0.0
      %2137 = vmatpush1.msra.mxu0 0.0
      %2138 = vmatprep.subr.mxu0 0.0
      %2139 = vmatpush1.msra.mxu0 0.0
      %2140 = vmatprep.subr.mxu0 0.0
      %2141 = vmatpush1.msra.mxu0 0.0
      %2142 = vmatprep.subr.mxu0 0.0
      %2143 = vmatpush1.msra.mxu0 0.0
      %2144 = vmatprep.subr.mxu0 0.0
      %2145 = vmatpush1.msra.mxu0 0.0
      %2146 = vmatprep.subr.mxu0 0.0
      %2147 = vmatpush1.msra.mxu0 0.0
      %2148 = vmatprep.subr.mxu0 0.0
      %2149 = vmatpush1.msra.mxu0 0.0
      %2150 = vmatprep.subr.mxu0 0.0
      %2151 = vmatpush1.msra.mxu0 0.0
      %2152 = vmatprep.subr.mxu0 0.0
      %2153 = vmatpush1.msra.mxu0 0.0
      %2154 = vmatprep.subr.mxu0 0.0
      %2155 = vmatpush1.msra.mxu0 0.0
      %2156 = vmatprep.subr.mxu0 0.0
      %2157 = vmatpush1.msra.mxu0 0.0
      %2158 = vmatprep.subr.mxu0 0.0
      %2159 = vmatpush1.msra.mxu0 0.0
      %2160 = vmatprep.subr.mxu0 0.0
      %2161 = vmatpush1.msra.mxu0 0.0
      %2162 = vmatprep.subr.mxu0 0.0
      %2163 = vmatpush1.msra.mxu0 0.0
      %2164 = vmatprep.subr.mxu0 0.0
      %2165 = vmatpush1.msra.mxu0 0.0
      %2166 = vmatprep.subr.mxu0 0.0
      %2167 = vmatpush1.msra.mxu0 0.0
      %2168 = vmatprep.subr.mxu0 0.0
      %2169 = vmatpush1.msra.mxu0 0.0
      %2170 = vmatprep.subr.mxu0 0.0
      %2171 = vmatpush1.msra.mxu0 0.0
      %2172 = vmatprep.subr.mxu0 0.0
      %2173 = vmatpush1.msra.mxu0 0.0
      %2174 = vmatprep.subr.mxu0 0.0
      %2175 = vmatpush1.msra.mxu0 0.0
      %2176 = vmatprep.subr.mxu0 0.0
      %2177 = vmatpush1.msra.mxu0 0.0
      %2178 = vmatprep.subr.mxu0 0.0
      %2179 = vmatpush1.msra.mxu0 0.0
      %2180 = vmatprep.subr.mxu0 0.0
      %2181 = vmatpush1.msra.mxu0 0.0
      %2182 = vmatprep.subr.mxu0 0.0
      %2183 = vmatpush1.msra.mxu0 0.0
      %2184 = vmatprep.mubr.f32.mxu0 0.0
      %2185 = vmatmul.mubr.f32.gmra.mrb[0].mxu0 %v2118
      %v2186 = vpop.f32.mrb[0].mxu0
      %v2187 = vadd.f32 0.0, %v2186
      %v2188 = vpop.f32.mrb[0].mxu0
      %v2189 = vadd.f32 0.0, %v2188
      %2190 = vdwg.mxu0
      %v2193 = vcombine.low %v2187, %v2189
      %v2195 = vunpack.c.l.s4 1966171168
      %v2196 = vunpack.c.0.s8 %v2195
      %v2197 = vlaneseq
      %v2198 = vshrl.u32 %v2197, 7
      %v2199 = vsub.s32 %v2196, %v2198
      %v2200 = vrot.slane %v2193, %v2199
      %v2201 = vcombine.high %v2200, %v2200
      %v2203 = vunpack.c.l.s4 1966171168
      %v2204 = vunpack.c.0.s8 %v2203
      %v2205 = vlaneseq
      %v2206 = vshrl.u32 %v2205, 7
      %v2207 = vsub.s32 %v2204, %v2206
      %v2208 = vrot.slane %v2200, %v2207
      %v2210 = vunpack.c.l.s4 1966171168
      %v2211 = vunpack.c.0.s8 %v2210
      %v2212 = vlaneseq
      %v2213 = vshrl.u32 %v2212, 7
      %v2214 = vsub.s32 %v2211, %v2213
      %v2215 = vrot.slane %v2201, %v2214
      %s2218 = scalar_lea.vmem %s264, 1
      %2219 = vst.msk [vmem:[%s2218] ss:$4 sm:$0x3] %vm2089, %v2208
      %s2220 = scalar_lea.vmem %s264, 9
      %2221 = vst.msk [vmem:[%s2220] ss:$4 sm:$0x3] %vm2089, %v2215
      %v2222 = vsel %vm2114, -inf, %v2093
      %v2223 = vsel %vm1922, %v2222, -inf
      %2224 = vmax.xlane.f32.xlu0 %v2223
      %v2225 = vpop.xlane.xlu0 %2224
      %vm2226 = vcmp.eq.f32.partialorder %v2222, %v2225
      %v2227 = vsel %vm2226, %v1909, 6
      %v2228 = vsel %vm1922, %v2227, 2147483647
      %v2229 = vand.u32 %v2228, 65535
      %v2230 = vshra.s32 %v2228, 16
      %v2231 = vcvt.s32.f32 %v2229
      %v2232 = vcvt.s32.f32 %v2230
      %2233 = vmin.xlane.f32.xlu0 %v2232
      %v2234 = vpop.xlane.xlu0 %2233
      %vm2235 = vcmp.eq.f32.partialorder %v2232, %v2234
      %v2236 = vsel %vm2235, %v2231, inf
      %2237 = vmin.xlane.f32.xlu0 %v2236
      %v2238 = vpop.xlane.xlu0 %2237
      %v2239 = vcvt.f32.s32 %v2238
      %v2240 = vcvt.f32.s32 %v2234
      %v2241 = vshll.u32 %v2240, 16
      %v2242 = vadd.s32 %v2241, %v2239
      %vm2243 = vcmp.eq.s32.totalorder %v1909, %v2242
      %v2244 = vsel %vm2243, 1, 0
      %v2245 = vcvt.s32.f32 %v2244
      %v2247 = vsel %vm1977, %v2245, 0
      %2249 = vmatprep.subr.mxu0 %v1986
      %2250 = vmatpush1.msra.mxu0 %v1983
      %2251 = vmatprep.subr.mxu0 0.0
      %2252 = vmatpush1.msra.mxu0 0.0
      %2253 = vmatprep.subr.mxu0 0.0
      %2254 = vmatpush1.msra.mxu0 0.0
      %2255 = vmatprep.subr.mxu0 0.0
      %2256 = vmatpush1.msra.mxu0 0.0
      %2257 = vmatprep.subr.mxu0 0.0
      %2258 = vmatpush1.msra.mxu0 0.0
      %2259 = vmatprep.subr.mxu0 0.0
      %2260 = vmatpush1.msra.mxu0 0.0
      %2261 = vmatprep.subr.mxu0 0.0
      %2262 = vmatpush1.msra.mxu0 0.0
      %2263 = vmatprep.subr.mxu0 0.0
      %2264 = vmatpush1.msra.mxu0 0.0
      %2265 = vmatprep.subr.mxu0 0.0
      %2266 = vmatpush1.msra.mxu0 0.0
      %2267 = vmatprep.subr.mxu0 0.0
      %2268 = vmatpush1.msra.mxu0 0.0
      %2269 = vmatprep.subr.mxu0 0.0
      %2270 = vmatpush1.msra.mxu0 0.0
      %2271 = vmatprep.subr.mxu0 0.0
      %2272 = vmatpush1.msra.mxu0 0.0
      %2273 = vmatprep.subr.mxu0 0.0
      %2274 = vmatpush1.msra.mxu0 0.0
      %2275 = vmatprep.subr.mxu0 0.0
      %2276 = vmatpush1.msra.mxu0 0.0
      %2277 = vmatprep.subr.mxu0 0.0
      %2278 = vmatpush1.msra.mxu0 0.0
      %2279 = vmatprep.subr.mxu0 0.0
      %2280 = vmatpush1.msra.mxu0 0.0
      %2281 = vmatprep.subr.mxu0 0.0
      %2282 = vmatpush1.msra.mxu0 0.0
      %2283 = vmatprep.subr.mxu0 0.0
      %2284 = vmatpush1.msra.mxu0 0.0
      %2285 = vmatprep.subr.mxu0 0.0
      %2286 = vmatpush1.msra.mxu0 0.0
      %2287 = vmatprep.subr.mxu0 0.0
      %2288 = vmatpush1.msra.mxu0 0.0
      %2289 = vmatprep.subr.mxu0 0.0
      %2290 = vmatpush1.msra.mxu0 0.0
      %2291 = vmatprep.subr.mxu0 0.0
      %2292 = vmatpush1.msra.mxu0 0.0
      %2293 = vmatprep.subr.mxu0 0.0
      %2294 = vmatpush1.msra.mxu0 0.0
      %2295 = vmatprep.subr.mxu0 0.0
      %2296 = vmatpush1.msra.mxu0 0.0
      %2297 = vmatprep.subr.mxu0 0.0
      %2298 = vmatpush1.msra.mxu0 0.0
      %2299 = vmatprep.subr.mxu0 0.0
      %2300 = vmatpush1.msra.mxu0 0.0
      %2301 = vmatprep.subr.mxu0 0.0
      %2302 = vmatpush1.msra.mxu0 0.0
      %2303 = vmatprep.subr.mxu0 0.0
      %2304 = vmatpush1.msra.mxu0 0.0
      %2305 = vmatprep.subr.mxu0 0.0
      %2306 = vmatpush1.msra.mxu0 0.0
      %2307 = vmatprep.subr.mxu0 0.0
      %2308 = vmatpush1.msra.mxu0 0.0
      %2309 = vmatprep.subr.mxu0 0.0
      %2310 = vmatpush1.msra.mxu0 0.0
      %2311 = vmatprep.subr.mxu0 0.0
      %2312 = vmatpush1.msra.mxu0 0.0
      %2313 = vmatprep.mubr.f32.mxu0 0.0
      %2314 = vmatmul.mubr.f32.gmra.mrb[0].mxu0 %v2247
      %v2315 = vpop.f32.mrb[0].mxu0
      %v2316 = vadd.f32 0.0, %v2315
      %v2317 = vpop.f32.mrb[0].mxu0
      %v2318 = vadd.f32 0.0, %v2317
      %2319 = vdwg.mxu0
      %v2322 = vcombine.low %v2316, %v2318
      %v2324 = vunpack.c.l.s4 1966171168
      %v2325 = vunpack.c.0.s8 %v2324
      %v2326 = vlaneseq
      %v2327 = vshrl.u32 %v2326, 7
      %v2328 = vsub.s32 %v2325, %v2327
      %v2329 = vrot.slane %v2322, %v2328
      %v2330 = vcombine.high %v2329, %v2329
      %v2332 = vunpack.c.l.s4 1966171168
      %v2333 = vunpack.c.0.s8 %v2332
      %v2334 = vlaneseq
      %v2335 = vshrl.u32 %v2334, 7
      %v2336 = vsub.s32 %v2333, %v2335
      %v2337 = vrot.slane %v2329, %v2336
      %v2339 = vunpack.c.l.s4 1966171168
      %v2340 = vunpack.c.0.s8 %v2339
      %v2341 = vlaneseq
      %v2342 = vshrl.u32 %v2341, 7
      %v2343 = vsub.s32 %v2340, %v2342
      %v2344 = vrot.slane %v2330, %v2343
      %s2347 = scalar_lea.vmem %s264, 2
      %2348 = vst.msk [vmem:[%s2347] ss:$4 sm:$0x3] %vm2089, %v2337
      %s2349 = scalar_lea.vmem %s264, 10
      %2350 = vst.msk [vmem:[%s2349] ss:$4 sm:$0x3] %vm2089, %v2344
      %p2351 = scmp.lt.s32.totalorder %s16, 1
      %s2352 = scalar_select %p2351, %s16, 1
      %s2353 = smul.addr %s2352, 4
      %s2354 = smul.addr %s2353, 4
      %s2355 = scalar_lea.vmem %s5, %s2354
      // Predicated region
      $region41: #{tpu_custom_call.1} parent=39 // pred_check
        %p2356 = pneg %p154
      $region42: #{tpu_custom_call.1} parent=39 // pred_check_branch
        %2358 = sbr.rel (%p2356) target = $region44
      $region43: #{tpu_custom_call.1} parent=39 // pred_region
        _
      $region44: #{tpu_custom_call.1} parent=39 // pred_fallthru
        _
    $region40: #{tpu_custom_call.1} parent=5 // pred_fallthru
      _
    %p2359 = scmp.le.s32.totalorder 2, %s11
    // Predicated region
    $region45: #{tpu_custom_call.1} parent=5 // pred_check
      %p2360 = pneg %p2359
    $region46: #{tpu_custom_call.1} parent=5 // pred_check_branch
      %2362 = sbr.rel (%p2360) target = $region48
    $region47: #{tpu_custom_call.1} parent=5 // pred_region
      %s2363 = ssub.s32 %s11, 2
      // Predicated region
      $region49: #{tpu_custom_call.1} parent=47 // pred_check
        %p2364 = pneg %p160
      $region50: #{tpu_custom_call.1} parent=47 // pred_check_branch
        %2366 = sbr.rel (%p2364) target = $region52
      $region51: #{tpu_custom_call.1} parent=47 // pred_region
        %p2367 = scmp.lt.s32.totalorder %s17, 1
        %s2368 = scalar_select %p2367, %s17, 1
        %s2369 = smul.addr %s2368, 4
        %s2370 = smul.addr %s2369, 4
        %s2371 = scalar_lea.vmem %s5, %s2370
      $region52: #{tpu_custom_call.1} parent=47 // pred_fallthru
        _
    $region48: #{tpu_custom_call.1} parent=5 // pred_fallthru
      _
  $region6: #{tpu_custom_call.1} parent=0 // loop_footer
    %s15 = sadd.s32 1, %s11
  $region7: #{tpu_custom_call.1} parent=0 // loop_footer_branch
    %10 = sbr.rel target = $region3
  $region8: #{tpu_custom_call.1} parent=0 // loop_exit
    _

</llo_original>
